<compile_context>
chip_gen: v6e
topology: v6e:2x2x1
jax: 0.10.0
libtpu: 0.0.40
codegen_flags: <defaults>
</compile_context>

<pallas_src>
import functools

import jax
import jax.numpy as jnp
from jax.experimental import pallas as pl
from jax.experimental.pallas import tpu as pltpu


# --------------------------------------------------------------------------- #
# Pallas kernel
# --------------------------------------------------------------------------- #
def _depth_wise_kernel(x_ref, w1_ref, b1_ref, a1_ref, wdw_ref, b2_ref, a2_ref,
                       w3_ref, b3_ref, o_ref, *, H, W, stride, residual):
    # x_ref  : (1, H*W, Cin)  flattened spatial (column-parity grouped if stride==2)
    # w1_ref : (Cin, C1)      1x1 conv weight with BN scale folded in
    # wdw_ref: (9, 1, C2)     3x3 depthwise weight (taps flattened), BN scale folded
    # w3_ref : (C2, C3)       1x1 projection weight with BN scale folded in
    # b*_ref : (1, C)         BN additive shifts
    # a*_ref : (1, C)         PReLU per-channel slopes
    # o_ref  : (1, Ho*Wo, C3) strided output
    HW = H * W
    C1 = w1_ref.shape[1]
    C2 = wdw_ref.shape[2]

    x = x_ref[0]                                                  # (HW, Cin) f32

    # ---- Conv_block #1: 1x1 conv (BN scale folded) + shift + PReLU ---------
    y = jnp.dot(x, w1_ref[...], preferred_element_type=jnp.float32)
    y = y + b1_ref[...]
    y = jnp.where(y >= 0.0, y, y * a1_ref[...])                   # (HW, C1)

    # ---- Conv_block #2: 3x3 depthwise conv, padding=1 (BN scale folded) ----
    if stride == 1:
        pad = jnp.zeros((W + 1, C1), jnp.float32)
        ypad = jnp.concatenate([pad, y, pad], axis=0)             # (HW + 2W + 2, C1)
        col = jax.lax.broadcasted_iota(jnp.int32, (HW, 1), 0) % W
        m_left = (col >= 1).astype(jnp.float32)                   # dw == -1 valid
        m_right = (col <= W - 2).astype(jnp.float32)              # dw == +1 valid
        acc = jnp.zeros((HW, C2), jnp.float32)
        for kh in range(3):
            for kw in range(3):
                off = (kh - 1) * W + (kw - 1)
                t = ypad[W + 1 + off: W + 1 + off + HW]           # flat shift
                if kw == 0:
                    t = t * m_left
                elif kw == 2:
                    t = t * m_right
                acc = acc + t * wdw_ref[kh * 3 + kw]
    else:
        # Wrapper grouped the spatial rows by column parity:
        #   y[:H*Wh] -> even columns (j = 2*jo), y[H*Wh:] -> odd columns.
        # Only the even (kept) output columns are computed; every tap is a plain
        # flat shift of one parity group (pitch Wh), no strided access needed.
        Wh = W // 2
        HWh = H * Wh
        y_e, y_o = y[:HWh], y[HWh:]
        pad = jnp.zeros((Wh + 1, C1), jnp.float32)
        ype = jnp.concatenate([pad, y_e, pad], axis=0)
        ypo = jnp.concatenate([pad, y_o, pad], axis=0)
        colh = jax.lax.broadcasted_iota(jnp.int32, (HWh, 1), 0) % Wh
        m_left = (colh >= 1).astype(jnp.float32)                  # source col jo-1 valid
        acc = jnp.zeros((HWh, C2), jnp.float32)
        for kh in range(3):
            dh = kh - 1
            for kw in range(3):
                if kw == 1:                       # even source column (index jo)
                    off = dh * Wh
                    t = ype[Wh + 1 + off: Wh + 1 + off + HWh]
                elif kw == 2:                     # odd source column (index jo)
                    off = dh * Wh
                    t = ypo[Wh + 1 + off: Wh + 1 + off + HWh]
                else:                             # kw == 0: odd column (index jo-1)
                    off = dh * Wh - 1
                    t = ypo[Wh + 1 + off: Wh + 1 + off + HWh] * m_left
                acc = acc + t * wdw_ref[kh * 3 + kw]

    z = acc + b2_ref[...]
    z = jnp.where(z >= 0.0, z, z * a2_ref[...])

    # ---- apply the row stride (keep i % 2 == 0): aligned reshape + slice ----
    if stride == 2:
        Wh = W // 2
        z = z.reshape(H // 2, W, C2)[:, :Wh, :].reshape((H // 2) * Wh, C2)

    # ---- Linear_block: 1x1 projection (BN scale folded) + shift ------------
    p = jnp.dot(z, w3_ref[...], preferred_element_type=jnp.float32)
    p = p + b3_ref[...]

    if residual:                                  # only reachable with stride == 1
        p = p + x
    o_ref[0] = p.astype(o_ref.dtype)


# --------------------------------------------------------------------------- #
# Wrapper
# --------------------------------------------------------------------------- #
def depth_wise_forward(x, params, *, stride=2, residual=False):
    """x: (N, H, W, Cin) float32, NHWC."""
    N, H, W, Cin = x.shape
    (w1, s1, b1, a1, wdw9, s2, b2, a2, w3, s3, b3) = params
    C1 = w1.shape[1]
    C2 = wdw9.shape[2]
    C3 = w3.shape[1]

    if stride not in (1, 2):
        raise NotImplementedError("Depth_Wise kernel supports stride 1 or 2")
    if residual and (stride != 1 or C3 != Cin):
        raise ValueError("residual=True requires stride==1 and c3_out == c1_in")
    if stride == 2 and (H % 2 or W % 2):
        raise ValueError("stride==2 requires even H and W")

    # Fold BN scales into the conv weights (host-side, zero kernel cost).
    w1f = (w1 * s1).astype(jnp.float32)                          # (Cin, C1)
    wdwf = (wdw9 * s2.reshape(1, 1, C2)).astype(jnp.float32)     # (9, 1, C2)
    w3f = (w3 * s3).astype(jnp.float32)                          # (C2, C3)

    Ho, Wo = H // stride, W // stride

    if stride == 2:
        # Group spatial rows by column parity (even-j block, then odd-j block)
        # so the in-kernel depthwise taps are plain flat shifts and only the
        # kept columns are computed.  Pure wrapper-side layout glue.
        xe = x[:, :, 0::2, :].reshape(N, H * (W // 2), Cin)
        xo = x[:, :, 1::2, :].reshape(N, H * (W // 2), Cin)
        x_flat = jnp.concatenate([xe, xo], axis=1)               # (N, H*W, Cin)
    else:
        x_flat = x.reshape(N, H * W, Cin)

    ops = (w1f, b1, a1, wdwf, b2, a2, w3f, b3)

    def _bcast_spec(p):
        nd = p.ndim
        return pl.BlockSpec(p.shape, lambda n, _nd=nd: (0,) * _nd)

    kernel = functools.partial(_depth_wise_kernel, H=H, W=W,
                               stride=stride, residual=residual)

    # VMEM budget: double-buffered x/out blocks + resident params + in-flight
    # f32 intermediates (y / padded taps / acc / z), with ~2x headroom.
    cmax = max(Cin, C1, C2, C3)
    working = 4 * (2 * H * W * Cin + 2 * Ho * Wo * C3 + 14 * H * W * cmax
                   + Cin * C1 + C2 * C3 + 12 * cmax)
    vmem_limit = int(min(100 * 2 ** 20, max(4 * 2 ** 20, 2 * working)))

    out_flat = pl.pallas_call(
        kernel,
        out_shape=jax.ShapeDtypeStruct((N, Ho * Wo, C3), jnp.float32),
        grid_spec=pltpu.PrefetchScalarGridSpec(
            num_scalar_prefetch=0,
            grid=(N,),
            in_specs=[pl.BlockSpec((1, H * W, Cin), lambda n: (n, 0, 0))]
                     + [_bcast_spec(p) for p in ops],
            out_specs=pl.BlockSpec((1, Ho * Wo, C3), lambda n: (n, 0, 0)),
        ),
        compiler_params=pltpu.CompilerParams(
            dimension_semantics=("parallel",),
            vmem_limit_bytes=vmem_limit),
    )(x_flat, *ops)

    return out_flat.reshape(N, Ho, Wo, C3)


# --------------------------------------------------------------------------- #
# Deterministic parameter construction (BN folded into scale/shift)
# --------------------------------------------------------------------------- #
def make_params(key, c1, c2, c3):
    (c1_in, c1_out), (c2_in, c2_out), (c3_in, c3_out) = c1, c2, c3
    assert c1_out == c2_in == c2_out == c3_in
    ks = jax.random.split(key, 8)
    eps = 1e-5

    def bn(k, c):
        kg, kb, km, kv = jax.random.split(k, 4)
        gamma = 1.0 + 0.1 * jax.random.normal(kg, (c,), jnp.float32)
        beta = 0.1 * jax.random.normal(kb, (c,), jnp.float32)
        mean = 0.1 * jax.random.normal(km, (c,), jnp.float32)
        var = jnp.abs(jax.random.normal(kv, (c,), jnp.float32)) + 0.5
        scale = gamma / jnp.sqrt(var + eps)
        shift = beta - mean * scale
        return scale.reshape(1, c), shift.reshape(1, c)

    w1 = 0.3 * jax.random.normal(ks[0], (c1_in, c1_out), jnp.float32)
    s1, b1 = bn(ks[1], c1_out)
    a1 = (0.25 + 0.05 * jax.random.normal(ks[2], (c1_out,), jnp.float32)).reshape(1, c1_out)

    wdw = 0.3 * jax.random.normal(ks[3], (3, 3, c2_out), jnp.float32)
    s2, b2 = bn(ks[4], c2_out)
    a2 = (0.25 + 0.05 * jax.random.normal(ks[5], (c2_out,), jnp.float32)).reshape(1, c2_out)

    w3 = 0.3 * jax.random.normal(ks[6], (c3_in, c3_out), jnp.float32)
    s3, b3 = bn(ks[7], c3_out)

    wdw9 = wdw.reshape(9, 1, c2_out)
    return (w1, s1, b1, a1, wdw9, s2, b2, a2, w3, s3, b3)


# --------------------------------------------------------------------------- #
# Pure-JAX reference (NHWC), for correctness checking only
# --------------------------------------------------------------------------- #
def reference_forward(x, params, *, stride=2, residual=False):
    (w1, s1, b1, a1, wdw9, s2, b2, a2, w3, s3, b3) = params
    dn = ("NHWC", "HWIO", "NHWC")
    bc = lambda v: v.reshape(1, 1, 1, -1)
    wdw = wdw9.reshape(3, 3, 1, -1)

    y = jax.lax.conv_general_dilated(x, w1.reshape(1, 1, *w1.shape), (1, 1),
                                     "VALID", dimension_numbers=dn)
    y = y * bc(s1) + bc(b1)
    y = jnp.where(y >= 0, y, y * bc(a1))

    z = jax.lax.conv_general_dilated(y, wdw, (stride, stride), ((1, 1), (1, 1)),
                                     dimension_numbers=dn,
                                     feature_group_count=wdw.shape[-1])
    z = z * bc(s2) + bc(b2)
    z = jnp.where(z >= 0, z, z * bc(a2))

    p = jax.lax.conv_general_dilated(z, w3.reshape(1, 1, *w3.shape), (1, 1),
                                     "VALID", dimension_numbers=dn)
    p = p * bc(s3) + bc(b3)
    return x + p if residual else p


# --------------------------------------------------------------------------- #
if __name__ == "__main__":
    key = jax.random.PRNGKey(0)
    kx, kp = jax.random.split(key)

    N, H, W = 2, 16, 16
    c1, c2, c3 = (4, 8), (8, 8), (8, 4)

    # PyTorch-style NCHW input, transposed to the kernel's NHWC layout.
    x_nchw = jax.random.normal(kx, (N, c1[0], H, W), jnp.float32)
    x = jnp.transpose(x_nchw, (0, 2, 3, 1))
    params = make_params(kp, c1, c2, c3)

    # Default Depth_Wise: kernel=(3,3), stride=(2,2), padding=(1,1), residual=False.
    out = jax.block_until_ready(depth_wise_forward(x, params, stride=2, residual=False))
    ref = reference_forward(x, params, stride=2, residual=False)
    assert out.shape == (N, (H - 1) // 2 + 1, (W - 1) // 2 + 1, c3[1])
    err = float(jnp.max(jnp.abs(out - ref)))
    if err > 1e-3:
        raise AssertionError(f"mismatch (stride=2, residual=False): max abs err {err}")

    # Residual variant (stride=1, c3_out == c1_in) to exercise the shortcut path.
    out_r = jax.block_until_ready(depth_wise_forward(x, params, stride=1, residual=True))
    ref_r = reference_forward(x, params, stride=1, residual=True)
    err_r = float(jnp.max(jnp.abs(out_r - ref_r)))
    if err_r > 1e-3:
        raise AssertionError(f"mismatch (stride=1, residual=True): max abs err {err_r}")

    print("KERNEL_OK")
</pallas_src>

<mosaic_0001>
module attributes {stable_mosaic.version = 11 : i64} {
  func.func @_depth_wise_kernel(%arg0: i32, %arg1: memref<1x256x4xf32, #tpu.memory_space<vmem>>, %arg2: memref<4x8xf32, #tpu.memory_space<vmem>>, %arg3: memref<1x8xf32, #tpu.memory_space<vmem>>, %arg4: memref<1x8xf32, #tpu.memory_space<vmem>>, %arg5: memref<9x1x8xf32, #tpu.memory_space<vmem>>, %arg6: memref<1x8xf32, #tpu.memory_space<vmem>>, %arg7: memref<1x8xf32, #tpu.memory_space<vmem>>, %arg8: memref<8x4xf32, #tpu.memory_space<vmem>>, %arg9: memref<1x4xf32, #tpu.memory_space<vmem>>, %arg10: memref<1x64x4xf32, #tpu.memory_space<vmem>>) attributes {dimension_semantics = [#tpu.dimension_semantics<parallel>], iteration_bounds = array<i64: 2>, scalar_prefetch = 0 : i64, scratch_operands = 0 : i64, tpu.core_type = #tpu.core_type<tc>, window_params = [{transform_indices = @transform_0, window_bounds = array<i64: 1, 256, 4>}, {pipeline_mode = #tpu.pipeline_mode<synchronous>, transform_indices = @transform_1, window_bounds = array<i64: 4, 8>}, {pipeline_mode = #tpu.pipeline_mode<synchronous>, transform_indices = @transform_2, window_bounds = array<i64: 1, 8>}, {pipeline_mode = #tpu.pipeline_mode<synchronous>, transform_indices = @transform_3, window_bounds = array<i64: 1, 8>}, {pipeline_mode = #tpu.pipeline_mode<synchronous>, transform_indices = @transform_4, window_bounds = array<i64: 9, 1, 8>}, {pipeline_mode = #tpu.pipeline_mode<synchronous>, transform_indices = @transform_5, window_bounds = array<i64: 1, 8>}, {pipeline_mode = #tpu.pipeline_mode<synchronous>, transform_indices = @transform_6, window_bounds = array<i64: 1, 8>}, {pipeline_mode = #tpu.pipeline_mode<synchronous>, transform_indices = @transform_7, window_bounds = array<i64: 8, 4>}, {pipeline_mode = #tpu.pipeline_mode<synchronous>, transform_indices = @transform_8, window_bounds = array<i64: 1, 4>}, {transform_indices = @transform_9, window_bounds = array<i64: 1, 64, 4>}]} {
    %c0 = arith.constant 0 : index
    %c0_0 = arith.constant 0 : index
    %c0_1 = arith.constant 0 : index
    %0 = vector.load %arg1[%c0, %c0_0, %c0_1] : memref<1x256x4xf32, #tpu.memory_space<vmem>>, vector<1x256x4xf32>
    %1 = vector.shape_cast %0 : vector<1x256x4xf32> to vector<256x4xf32>
    %c0_2 = arith.constant 0 : index
    %c0_3 = arith.constant 0 : index
    %2 = vector.load %arg2[%c0_2, %c0_3] : memref<4x8xf32, #tpu.memory_space<vmem>>, vector<4x8xf32>
    %cst = arith.constant dense<0.000000e+00> : vector<256x8xf32>
    %3 = tpu.matmul %1, %2, %cst {dimension_numbers = #tpu.dot_dimension_numbers<[1], [0], [0], [1], [0, 0, 1, 1], [], []>} : vector<256x4xf32>, vector<4x8xf32>, vector<256x8xf32> -> vector<256x8xf32>
    %c0_4 = arith.constant 0 : index
    %c0_5 = arith.constant 0 : index
    %4 = vector.load %arg3[%c0_4, %c0_5] : memref<1x8xf32, #tpu.memory_space<vmem>>, vector<1x8xf32>
    %5 = vector.broadcast %4 : vector<1x8xf32> to vector<256x8xf32>
    %6 = arith.addf %3, %5 : vector<256x8xf32>
    %cst_6 = arith.constant 0.000000e+00 : f32
    %7 = vector.broadcast %cst_6 : f32 to vector<256x8xf32>
    %8 = arith.cmpf oge, %6, %7 : vector<256x8xf32>
    %c0_7 = arith.constant 0 : index
    %c0_8 = arith.constant 0 : index
    %9 = vector.load %arg4[%c0_7, %c0_8] : memref<1x8xf32, #tpu.memory_space<vmem>>, vector<1x8xf32>
    %10 = vector.broadcast %9 : vector<1x8xf32> to vector<256x8xf32>
    %11 = arith.mulf %6, %10 : vector<256x8xf32>
    %12 = arith.select %8, %6, %11 : vector<256x8xi1>, vector<256x8xf32>
    %13 = vector.extract_strided_slice %12 {offsets = [0, 0], sizes = [128, 8], strides = [1, 1]} : vector<256x8xf32> to vector<128x8xf32>
    %14 = vector.extract_strided_slice %12 {offsets = [128, 0], sizes = [128, 8], strides = [1, 1]} : vector<256x8xf32> to vector<128x8xf32>
    %cst_9 = arith.constant 0.000000e+00 : f32
    %15 = vector.broadcast %cst_9 : f32 to vector<9x8xf32>
    %16 = tpu.concatenate %15, %13, %15 in 0 : vector<9x8xf32>, vector<128x8xf32>, vector<9x8xf32> -> vector<146x8xf32>
    %17 = tpu.concatenate %15, %14, %15 in 0 : vector<9x8xf32>, vector<128x8xf32>, vector<9x8xf32> -> vector<146x8xf32>
    %18 = tpu.iota {dimensions = array<i32: 0>} : vector<128x1xi32>
    %c8_i32 = arith.constant 8 : i32
    %c0_i32 = arith.constant 0 : i32
    %19 = arith.cmpi eq, %c8_i32, %c0_i32 : i32
    %c1_i32 = arith.constant 1 : i32
    %20 = arith.select %19, %c1_i32, %c8_i32 : i32
    %21 = vector.broadcast %20 : i32 to vector<128x1xi32>
    %22 = arith.remsi %18, %21 : vector<128x1xi32>
    %c0_i32_10 = arith.constant 0 : i32
    %23 = vector.broadcast %c0_i32_10 : i32 to vector<128x1xi32>
    %24 = arith.cmpi ne, %22, %23 : vector<128x1xi32>
    %c0_i32_11 = arith.constant 0 : i32
    %25 = vector.broadcast %c0_i32_11 : i32 to vector<128x1xi32>
    %26 = arith.cmpi slt, %22, %25 : vector<128x1xi32>
    %c0_i32_12 = arith.constant 0 : i32
    %27 = arith.cmpi slt, %20, %c0_i32_12 : i32
    %28 = vector.broadcast %27 : i1 to vector<128x1xi1>
    %29 = vector.broadcast %28 : vector<128x1xi1> to vector<128x1xi1>
    %30 = arith.xori %26, %29 : vector<128x1xi1>
    %31 = arith.andi %30, %24 : vector<128x1xi1>
    %32 = vector.broadcast %20 : i32 to vector<128x1xi32>
    %33 = arith.addi %22, %32 : vector<128x1xi32>
    %34 = arith.select %31, %33, %22 : vector<128x1xi1>, vector<128x1xi32>
    %c1_i32_13 = arith.constant 1 : i32
    %35 = vector.broadcast %c1_i32_13 : i32 to vector<128x1xi32>
    %36 = arith.cmpi sge, %34, %35 : vector<128x1xi32>
    %37 = arith.extui %36 : vector<128x1xi1> to vector<128x1xi32>
    %38 = arith.sitofp %37 : vector<128x1xi32> to vector<128x1xf32>
    %cst_14 = arith.constant 0.000000e+00 : f32
    %39 = vector.broadcast %cst_14 : f32 to vector<128x8xf32>
    %40 = vector.extract_strided_slice %17 {offsets = [0, 0], sizes = [128, 8], strides = [1, 1]} : vector<146x8xf32> to vector<128x8xf32>
    %41 = vector.broadcast %38 : vector<128x1xf32> to vector<128x8xf32>
    %42 = arith.mulf %40, %41 : vector<128x8xf32>
    %c0_15 = arith.constant 0 : index
    %c0_16 = arith.constant 0 : index
    %c0_17 = arith.constant 0 : index
    %43 = vector.load %arg5[%c0_15, %c0_16, %c0_17] : memref<9x1x8xf32, #tpu.memory_space<vmem>>, vector<1x1x8xf32>
    %44 = vector.shape_cast %43 : vector<1x1x8xf32> to vector<1x8xf32>
    %45 = vector.broadcast %44 : vector<1x8xf32> to vector<128x8xf32>
    %46 = arith.mulf %42, %45 : vector<128x8xf32>
    %47 = arith.addf %39, %46 : vector<128x8xf32>
    %48 = vector.extract_strided_slice %16 {offsets = [1, 0], sizes = [128, 8], strides = [1, 1]} : vector<146x8xf32> to vector<128x8xf32>
    %c1 = arith.constant 1 : index
    %c0_18 = arith.constant 0 : index
    %c0_19 = arith.constant 0 : index
    %49 = vector.load %arg5[%c1, %c0_18, %c0_19] : memref<9x1x8xf32, #tpu.memory_space<vmem>>, vector<1x1x8xf32>
    %50 = vector.shape_cast %49 : vector<1x1x8xf32> to vector<1x8xf32>
    %51 = vector.broadcast %50 : vector<1x8xf32> to vector<128x8xf32>
    %52 = arith.mulf %48, %51 : vector<128x8xf32>
    %53 = arith.addf %47, %52 : vector<128x8xf32>
    %54 = vector.extract_strided_slice %17 {offsets = [1, 0], sizes = [128, 8], strides = [1, 1]} : vector<146x8xf32> to vector<128x8xf32>
    %c2 = arith.constant 2 : index
    %c0_20 = arith.constant 0 : index
    %c0_21 = arith.constant 0 : index
    %55 = vector.load %arg5[%c2, %c0_20, %c0_21] : memref<9x1x8xf32, #tpu.memory_space<vmem>>, vector<1x1x8xf32>
    %56 = vector.shape_cast %55 : vector<1x1x8xf32> to vector<1x8xf32>
    %57 = vector.broadcast %56 : vector<1x8xf32> to vector<128x8xf32>
    %58 = arith.mulf %54, %57 : vector<128x8xf32>
    %59 = arith.addf %53, %58 : vector<128x8xf32>
    %60 = vector.extract_strided_slice %17 {offsets = [8, 0], sizes = [128, 8], strides = [1, 1]} : vector<146x8xf32> to vector<128x8xf32>
    %61 = vector.broadcast %38 : vector<128x1xf32> to vector<128x8xf32>
    %62 = arith.mulf %60, %61 : vector<128x8xf32>
    %c3 = arith.constant 3 : index
    %c0_22 = arith.constant 0 : index
    %c0_23 = arith.constant 0 : index
    %63 = vector.load %arg5[%c3, %c0_22, %c0_23] : memref<9x1x8xf32, #tpu.memory_space<vmem>>, vector<1x1x8xf32>
    %64 = vector.shape_cast %63 : vector<1x1x8xf32> to vector<1x8xf32>
    %65 = vector.broadcast %64 : vector<1x8xf32> to vector<128x8xf32>
    %66 = arith.mulf %62, %65 : vector<128x8xf32>
    %67 = arith.addf %59, %66 : vector<128x8xf32>
    %68 = vector.extract_strided_slice %16 {offsets = [9, 0], sizes = [128, 8], strides = [1, 1]} : vector<146x8xf32> to vector<128x8xf32>
    %c4 = arith.constant 4 : index
    %c0_24 = arith.constant 0 : index
    %c0_25 = arith.constant 0 : index
    %69 = vector.load %arg5[%c4, %c0_24, %c0_25] : memref<9x1x8xf32, #tpu.memory_space<vmem>>, vector<1x1x8xf32>
    %70 = vector.shape_cast %69 : vector<1x1x8xf32> to vector<1x8xf32>
    %71 = vector.broadcast %70 : vector<1x8xf32> to vector<128x8xf32>
    %72 = arith.mulf %68, %71 : vector<128x8xf32>
    %73 = arith.addf %67, %72 : vector<128x8xf32>
    %74 = vector.extract_strided_slice %17 {offsets = [9, 0], sizes = [128, 8], strides = [1, 1]} : vector<146x8xf32> to vector<128x8xf32>
    %c5 = arith.constant 5 : index
    %c0_26 = arith.constant 0 : index
    %c0_27 = arith.constant 0 : index
    %75 = vector.load %arg5[%c5, %c0_26, %c0_27] : memref<9x1x8xf32, #tpu.memory_space<vmem>>, vector<1x1x8xf32>
    %76 = vector.shape_cast %75 : vector<1x1x8xf32> to vector<1x8xf32>
    %77 = vector.broadcast %76 : vector<1x8xf32> to vector<128x8xf32>
    %78 = arith.mulf %74, %77 : vector<128x8xf32>
    %79 = arith.addf %73, %78 : vector<128x8xf32>
    %80 = vector.extract_strided_slice %17 {offsets = [16, 0], sizes = [128, 8], strides = [1, 1]} : vector<146x8xf32> to vector<128x8xf32>
    %81 = vector.broadcast %38 : vector<128x1xf32> to vector<128x8xf32>
    %82 = arith.mulf %80, %81 : vector<128x8xf32>
    %c6 = arith.constant 6 : index
    %c0_28 = arith.constant 0 : index
    %c0_29 = arith.constant 0 : index
    %83 = vector.load %arg5[%c6, %c0_28, %c0_29] : memref<9x1x8xf32, #tpu.memory_space<vmem>>, vector<1x1x8xf32>
    %84 = vector.shape_cast %83 : vector<1x1x8xf32> to vector<1x8xf32>
    %85 = vector.broadcast %84 : vector<1x8xf32> to vector<128x8xf32>
    %86 = arith.mulf %82, %85 : vector<128x8xf32>
    %87 = arith.addf %79, %86 : vector<128x8xf32>
    %88 = vector.extract_strided_slice %16 {offsets = [17, 0], sizes = [128, 8], strides = [1, 1]} : vector<146x8xf32> to vector<128x8xf32>
    %c7 = arith.constant 7 : index
    %c0_30 = arith.constant 0 : index
    %c0_31 = arith.constant 0 : index
    %89 = vector.load %arg5[%c7, %c0_30, %c0_31] : memref<9x1x8xf32, #tpu.memory_space<vmem>>, vector<1x1x8xf32>
    %90 = vector.shape_cast %89 : vector<1x1x8xf32> to vector<1x8xf32>
    %91 = vector.broadcast %90 : vector<1x8xf32> to vector<128x8xf32>
    %92 = arith.mulf %88, %91 : vector<128x8xf32>
    %93 = arith.addf %87, %92 : vector<128x8xf32>
    %94 = vector.extract_strided_slice %17 {offsets = [17, 0], sizes = [128, 8], strides = [1, 1]} : vector<146x8xf32> to vector<128x8xf32>
    %c8 = arith.constant 8 : index
    %c0_32 = arith.constant 0 : index
    %c0_33 = arith.constant 0 : index
    %95 = vector.load %arg5[%c8, %c0_32, %c0_33] : memref<9x1x8xf32, #tpu.memory_space<vmem>>, vector<1x1x8xf32>
    %96 = vector.shape_cast %95 : vector<1x1x8xf32> to vector<1x8xf32>
    %97 = vector.broadcast %96 : vector<1x8xf32> to vector<128x8xf32>
    %98 = arith.mulf %94, %97 : vector<128x8xf32>
    %99 = arith.addf %93, %98 : vector<128x8xf32>
    %c0_34 = arith.constant 0 : index
    %c0_35 = arith.constant 0 : index
    %100 = vector.load %arg6[%c0_34, %c0_35] : memref<1x8xf32, #tpu.memory_space<vmem>>, vector<1x8xf32>
    %101 = vector.broadcast %100 : vector<1x8xf32> to vector<128x8xf32>
    %102 = arith.addf %99, %101 : vector<128x8xf32>
    %cst_36 = arith.constant 0.000000e+00 : f32
    %103 = vector.broadcast %cst_36 : f32 to vector<128x8xf32>
    %104 = arith.cmpf oge, %102, %103 : vector<128x8xf32>
    %c0_37 = arith.constant 0 : index
    %c0_38 = arith.constant 0 : index
    %105 = vector.load %arg7[%c0_37, %c0_38] : memref<1x8xf32, #tpu.memory_space<vmem>>, vector<1x8xf32>
    %106 = vector.broadcast %105 : vector<1x8xf32> to vector<128x8xf32>
    %107 = arith.mulf %102, %106 : vector<128x8xf32>
    %108 = arith.select %104, %102, %107 : vector<128x8xi1>, vector<128x8xf32>
    %109 = vector.shape_cast %108 : vector<128x8xf32> to vector<8x16x8xf32>
    %110 = vector.extract_strided_slice %109 {offsets = [0, 0, 0], sizes = [8, 8, 8], strides = [1, 1, 1]} : vector<8x16x8xf32> to vector<8x8x8xf32>
    %111 = vector.shape_cast %110 : vector<8x8x8xf32> to vector<64x8xf32>
    %c0_39 = arith.constant 0 : index
    %c0_40 = arith.constant 0 : index
    %112 = vector.load %arg8[%c0_39, %c0_40] : memref<8x4xf32, #tpu.memory_space<vmem>>, vector<8x4xf32>
    %cst_41 = arith.constant dense<0.000000e+00> : vector<64x4xf32>
    %113 = tpu.matmul %111, %112, %cst_41 {dimension_numbers = #tpu.dot_dimension_numbers<[1], [0], [0], [1], [0, 0, 1, 1], [], []>} : vector<64x8xf32>, vector<8x4xf32>, vector<64x4xf32> -> vector<64x4xf32>
    %c0_42 = arith.constant 0 : index
    %c0_43 = arith.constant 0 : index
    %114 = vector.load %arg9[%c0_42, %c0_43] : memref<1x4xf32, #tpu.memory_space<vmem>>, vector<1x4xf32>
    %115 = vector.broadcast %114 : vector<1x4xf32> to vector<64x4xf32>
    %116 = arith.addf %113, %115 : vector<64x4xf32>
    %c0_44 = arith.constant 0 : index
    %c0_45 = arith.constant 0 : index
    %c0_46 = arith.constant 0 : index
    %117 = vector.load %arg10[%c0_44, %c0_45, %c0_46] : memref<1x64x4xf32, #tpu.memory_space<vmem>>, vector<1x64x4xf32>
    %118 = vector.shape_cast %117 : vector<1x64x4xf32> to vector<64x4xf32>
    %119 = vector.shape_cast %116 : vector<64x4xf32> to vector<1x64x4xf32>
    tpu.vector_store %arg10[%c0_44, %c0_45, %c0_46], %119 {strides = array<i32>} : memref<1x64x4xf32, #tpu.memory_space<vmem>>, vector<1x64x4xf32>,
    return
  }
  func.func @transform_0(%arg0: i32) -> (i32, i32, i32) {
    %c0_i32 = arith.constant 0 : i32
    %c0_i32_0 = arith.constant 0 : i32
    %c0_i32_1 = arith.constant 0 : i32
    return %arg0, %c0_i32, %c0_i32_0 : i32, i32, i32
  }
  func.func @transform_1(%arg0: i32) -> (i32, i32) {
    %c0_i32 = arith.constant 0 : i32
    %c0_i32_0 = arith.constant 0 : i32
    %c0_i32_1 = arith.constant 0 : i32
    return %c0_i32, %c0_i32_0 : i32, i32
  }
  func.func @transform_2(%arg0: i32) -> (i32, i32) {
    %c0_i32 = arith.constant 0 : i32
    %c0_i32_0 = arith.constant 0 : i32
    %c0_i32_1 = arith.constant 0 : i32
    return %c0_i32, %c0_i32_0 : i32, i32
  }
  func.func @transform_3(%arg0: i32) -> (i32, i32) {
    %c0_i32 = arith.constant 0 : i32
    %c0_i32_0 = arith.constant 0 : i32
    %c0_i32_1 = arith.constant 0 : i32
    return %c0_i32, %c0_i32_0 : i32, i32
  }
  func.func @transform_4(%arg0: i32) -> (i32, i32, i32) {
    %c0_i32 = arith.constant 0 : i32
    %c0_i32_0 = arith.constant 0 : i32
    %c0_i32_1 = arith.constant 0 : i32
    %c0_i32_2 = arith.constant 0 : i32
    return %c0_i32, %c0_i32_0, %c0_i32_1 : i32, i32, i32
  }
  func.func @transform_5(%arg0: i32) -> (i32, i32) {
    %c0_i32 = arith.constant 0 : i32
    %c0_i32_0 = arith.constant 0 : i32
    %c0_i32_1 = arith.constant 0 : i32
    return %c0_i32, %c0_i32_0 : i32, i32
  }
  func.func @transform_6(%arg0: i32) -> (i32, i32) {
    %c0_i32 = arith.constant 0 : i32
    %c0_i32_0 = arith.constant 0 : i32
    %c0_i32_1 = arith.constant 0 : i32
    return %c0_i32, %c0_i32_0 : i32, i32
  }
  func.func @transform_7(%arg0: i32) -> (i32, i32) {
    %c0_i32 = arith.constant 0 : i32
    %c0_i32_0 = arith.constant 0 : i32
    %c0_i32_1 = arith.constant 0 : i32
    return %c0_i32, %c0_i32_0 : i32, i32
  }
  func.func @transform_8(%arg0: i32) -> (i32, i32) {
    %c0_i32 = arith.constant 0 : i32
    %c0_i32_0 = arith.constant 0 : i32
    %c0_i32_1 = arith.constant 0 : i32
    return %c0_i32, %c0_i32_0 : i32, i32
  }
  func.func @transform_9(%arg0: i32) -> (i32, i32, i32) {
    %c0_i32 = arith.constant 0 : i32
    %c0_i32_0 = arith.constant 0 : i32
    %c0_i32_1 = arith.constant 0 : i32
    return %arg0, %c0_i32, %c0_i32_0 : i32, i32, i32
  }
}

</mosaic_0001>

<llo_original>
// kernel: tpu_custom_call.1
$region0: #{tpu_custom_call.1}
  #allocation0 [shape = 'u32[]', space=smem, size = 0x4, offset = 0x4, fixed_abs, tag = 'smem constant byte address 0x4 - core index']
  #allocation1 [shape = 'u32[144,128]{1,0:T(1,128)}', space=vmem, size = 0x12000, scoped, tag = 'internal scratch']
  %s0 = inlined_call_operand.vmem [shape: f32[2,256,4], index: 0, kind: input, shape index: {}]
  %s1 = inlined_call_operand.vmem [shape: f32[4,8], index: 1, kind: input, shape index: {}]
  %s2 = inlined_call_operand.vmem [shape: f32[1,8], index: 2, kind: input, shape index: {}]
  %s3 = inlined_call_operand.vmem [shape: f32[1,8], index: 3, kind: input, shape index: {}]
  %s4 = inlined_call_operand.vmem [shape: f32[9,1,8], index: 4, kind: input, shape index: {}]
  %s5 = inlined_call_operand.vmem [shape: f32[1,8], index: 5, kind: input, shape index: {}]
  %s6 = inlined_call_operand.vmem [shape: f32[1,8], index: 6, kind: input, shape index: {}]
  %s7 = inlined_call_operand.vmem [shape: f32[8,4], index: 7, kind: input, shape index: {}]
  %s8 = inlined_call_operand.vmem [shape: f32[1,4], index: 8, kind: input, shape index: {}]
  %s9 = inlined_call_operand.vmem [shape: f32[2,64,4], index: 9, kind: output, shape index: {}]
  %s10 = sld [smem:[#allocation0]]
  $region69: #{tpu_custom_call.1} parent=0
    _
  %s12 = ssub.s32 1, %s10
  %s13 = scalar_select 0, %s12, %s10
  loop: start=0, step=1, limit=4
  $region2: #{tpu_custom_call.1} parent=0 // loop_pre_header
    _
  $region3: #{tpu_custom_call.1} parent=0 // loop_header
    %s15 = sphi 0, %s19
    %p16 = scmp.ge.s32.totalorder %s15, 4
    %s25 = sphi 0, %s27
    %s28 = sphi 0, %s25
    %s29 = sphi 0, %s28
    %s45 = sphi 0, %s29
    %s49 = sphi 0, %s49
    %s51 = sphi 0, %s49
    %s52 = sphi 0, %s51
    %s66 = sphi 0, %s52
    %s70 = sphi 0, %s70
    %s72 = sphi 0, %s70
    %s73 = sphi 0, %s72
    %s87 = sphi 0, %s73
    %s91 = sphi 0, %s91
    %s93 = sphi 0, %s91
    %s94 = sphi 0, %s93
    %s108 = sphi 0, %s94
    %s112 = sphi 0, %s112
    %s114 = sphi 0, %s112
    %s115 = sphi 0, %s114
    %s129 = sphi 0, %s115
    %s133 = sphi 0, %s133
    %s135 = sphi 0, %s133
    %s136 = sphi 0, %s135
    %s150 = sphi 0, %s136
    %s154 = sphi 0, %s154
    %s156 = sphi 0, %s154
    %s157 = sphi 0, %s156
    %s171 = sphi 0, %s157
    %s175 = sphi 0, %s175
    %s177 = sphi 0, %s175
    %s178 = sphi 0, %s177
    %s192 = sphi 0, %s178
    %s196 = sphi 0, %s196
    %s198 = sphi 0, %s196
    %s199 = sphi 0, %s198
    %s213 = sphi 0, %s199
    %s219 = sphi 0, %s221
    %s222 = sphi 0, %s219
    %s223 = sphi 0, %s222
    %s239 = sphi 0, %s223
  $region4: #{tpu_custom_call.1} parent=0 // loop_header_branch
    %18 = sbr.rel (%p16) target = $region8
  $region5: #{tpu_custom_call.1} parent=0 // loop_body
    %s20 = ssub.s32 %s15, 1
    %s21 = ssub.s32 %s15, 2
    %s22 = sadd.s32 %s15, 1
    %s23 = ssub.s32 %s15, %s22
    %p24 = scmp.eq.s32.totalorder %s23, 0
    %s26 = sadd.s32 %s25, 1
    %s27 = scalar_select %p24, %s25, %s26
    %p30 = pneg %p24
    %p31 = scmp.eq.s32.totalorder %s15, 1
    %p32 = por %p30, %p31
    %p33 = scmp.ne.s32.totalorder %s25, %s28
    %p34 = scmp.eq.s32.totalorder %s15, 0
    %p35 = por %p33, %p34
    %p36 = scmp.ne.s32.totalorder %s25, %s28
    %p37 = scmp.eq.s32.totalorder %s20, 1
    %p38 = por %p36, %p37
    %p39 = scmp.ne.s32.totalorder %s28, %s29
    %p40 = scmp.eq.s32.totalorder %s20, 0
    %p41 = por %p39, %p40
    %p42 = scmp.ne.s32.totalorder %s28, %s29
    %p43 = scmp.eq.s32.totalorder %s21, 1
    %p44 = por %p42, %p43
    %p46 = scmp.ne.s32.totalorder %s29, %s45
    %p47 = scmp.eq.s32.totalorder %s21, 0
    %p48 = por %p46, %p47
    %s50 = sadd.s32 %s49, 1
    %p53 = scmp.eq.s32.totalorder %s15, 1
    %p54 = scmp.ne.s32.totalorder %s49, %s51
    %p55 = scmp.eq.s32.totalorder %s15, 0
    %p56 = por %p54, %p55
    %p57 = scmp.ne.s32.totalorder %s49, %s51
    %p58 = scmp.eq.s32.totalorder %s20, 1
    %p59 = por %p57, %p58
    %p60 = scmp.ne.s32.totalorder %s51, %s52
    %p61 = scmp.eq.s32.totalorder %s20, 0
    %p62 = por %p60, %p61
    %p63 = scmp.ne.s32.totalorder %s51, %s52
    %p64 = scmp.eq.s32.totalorder %s21, 1
    %p65 = por %p63, %p64
    %p67 = scmp.ne.s32.totalorder %s52, %s66
    %p68 = scmp.eq.s32.totalorder %s21, 0
    %p69 = por %p67, %p68
    %s71 = sadd.s32 %s70, 1
    %p74 = scmp.eq.s32.totalorder %s15, 1
    %p75 = scmp.ne.s32.totalorder %s70, %s72
    %p76 = scmp.eq.s32.totalorder %s15, 0
    %p77 = por %p75, %p76
    %p78 = scmp.ne.s32.totalorder %s70, %s72
    %p79 = scmp.eq.s32.totalorder %s20, 1
    %p80 = por %p78, %p79
    %p81 = scmp.ne.s32.totalorder %s72, %s73
    %p82 = scmp.eq.s32.totalorder %s20, 0
    %p83 = por %p81, %p82
    %p84 = scmp.ne.s32.totalorder %s72, %s73
    %p85 = scmp.eq.s32.totalorder %s21, 1
    %p86 = por %p84, %p85
    %p88 = scmp.ne.s32.totalorder %s73, %s87
    %p89 = scmp.eq.s32.totalorder %s21, 0
    %p90 = por %p88, %p89
    %s92 = sadd.s32 %s91, 1
    %p95 = scmp.eq.s32.totalorder %s15, 1
    %p96 = scmp.ne.s32.totalorder %s91, %s93
    %p97 = scmp.eq.s32.totalorder %s15, 0
    %p98 = por %p96, %p97
    %p99 = scmp.ne.s32.totalorder %s91, %s93
    %p100 = scmp.eq.s32.totalorder %s20, 1
    %p101 = por %p99, %p100
    %p102 = scmp.ne.s32.totalorder %s93, %s94
    %p103 = scmp.eq.s32.totalorder %s20, 0
    %p104 = por %p102, %p103
    %p105 = scmp.ne.s32.totalorder %s93, %s94
    %p106 = scmp.eq.s32.totalorder %s21, 1
    %p107 = por %p105, %p106
    %p109 = scmp.ne.s32.totalorder %s94, %s108
    %p110 = scmp.eq.s32.totalorder %s21, 0
    %p111 = por %p109, %p110
    %s113 = sadd.s32 %s112, 1
    %p116 = scmp.eq.s32.totalorder %s15, 1
    %p117 = scmp.ne.s32.totalorder %s112, %s114
    %p118 = scmp.eq.s32.totalorder %s15, 0
    %p119 = por %p117, %p118
    %p120 = scmp.ne.s32.totalorder %s112, %s114
    %p121 = scmp.eq.s32.totalorder %s20, 1
    %p122 = por %p120, %p121
    %p123 = scmp.ne.s32.totalorder %s114, %s115
    %p124 = scmp.eq.s32.totalorder %s20, 0
    %p125 = por %p123, %p124
    %p126 = scmp.ne.s32.totalorder %s114, %s115
    %p127 = scmp.eq.s32.totalorder %s21, 1
    %p128 = por %p126, %p127
    %p130 = scmp.ne.s32.totalorder %s115, %s129
    %p131 = scmp.eq.s32.totalorder %s21, 0
    %p132 = por %p130, %p131
    %s134 = sadd.s32 %s133, 1
    %p137 = scmp.eq.s32.totalorder %s15, 1
    %p138 = scmp.ne.s32.totalorder %s133, %s135
    %p139 = scmp.eq.s32.totalorder %s15, 0
    %p140 = por %p138, %p139
    %p141 = scmp.ne.s32.totalorder %s133, %s135
    %p142 = scmp.eq.s32.totalorder %s20, 1
    %p143 = por %p141, %p142
    %p144 = scmp.ne.s32.totalorder %s135, %s136
    %p145 = scmp.eq.s32.totalorder %s20, 0
    %p146 = por %p144, %p145
    %p147 = scmp.ne.s32.totalorder %s135, %s136
    %p148 = scmp.eq.s32.totalorder %s21, 1
    %p149 = por %p147, %p148
    %p151 = scmp.ne.s32.totalorder %s136, %s150
    %p152 = scmp.eq.s32.totalorder %s21, 0
    %p153 = por %p151, %p152
    %s155 = sadd.s32 %s154, 1
    %p158 = scmp.eq.s32.totalorder %s15, 1
    %p159 = scmp.ne.s32.totalorder %s154, %s156
    %p160 = scmp.eq.s32.totalorder %s15, 0
    %p161 = por %p159, %p160
    %p162 = scmp.ne.s32.totalorder %s154, %s156
    %p163 = scmp.eq.s32.totalorder %s20, 1
    %p164 = por %p162, %p163
    %p165 = scmp.ne.s32.totalorder %s156, %s157
    %p166 = scmp.eq.s32.totalorder %s20, 0
    %p167 = por %p165, %p166
    %p168 = scmp.ne.s32.totalorder %s156, %s157
    %p169 = scmp.eq.s32.totalorder %s21, 1
    %p170 = por %p168, %p169
    %p172 = scmp.ne.s32.totalorder %s157, %s171
    %p173 = scmp.eq.s32.totalorder %s21, 0
    %p174 = por %p172, %p173
    %s176 = sadd.s32 %s175, 1
    %p179 = scmp.eq.s32.totalorder %s15, 1
    %p180 = scmp.ne.s32.totalorder %s175, %s177
    %p181 = scmp.eq.s32.totalorder %s15, 0
    %p182 = por %p180, %p181
    %p183 = scmp.ne.s32.totalorder %s175, %s177
    %p184 = scmp.eq.s32.totalorder %s20, 1
    %p185 = por %p183, %p184
    %p186 = scmp.ne.s32.totalorder %s177, %s178
    %p187 = scmp.eq.s32.totalorder %s20, 0
    %p188 = por %p186, %p187
    %p189 = scmp.ne.s32.totalorder %s177, %s178
    %p190 = scmp.eq.s32.totalorder %s21, 1
    %p191 = por %p189, %p190
    %p193 = scmp.ne.s32.totalorder %s178, %s192
    %p194 = scmp.eq.s32.totalorder %s21, 0
    %p195 = por %p193, %p194
    %s197 = sadd.s32 %s196, 1
    %p200 = scmp.eq.s32.totalorder %s15, 1
    %p201 = scmp.ne.s32.totalorder %s196, %s198
    %p202 = scmp.eq.s32.totalorder %s15, 0
    %p203 = por %p201, %p202
    %p204 = scmp.ne.s32.totalorder %s196, %s198
    %p205 = scmp.eq.s32.totalorder %s20, 1
    %p206 = por %p204, %p205
    %p207 = scmp.ne.s32.totalorder %s198, %s199
    %p208 = scmp.eq.s32.totalorder %s20, 0
    %p209 = por %p207, %p208
    %p210 = scmp.ne.s32.totalorder %s198, %s199
    %p211 = scmp.eq.s32.totalorder %s21, 1
    %p212 = por %p210, %p211
    %p214 = scmp.ne.s32.totalorder %s199, %s213
    %p215 = scmp.eq.s32.totalorder %s21, 0
    %p216 = por %p214, %p215
    %s217 = ssub.s32 %s15, %s22
    %p218 = scmp.eq.s32.totalorder %s217, 0
    %s220 = sadd.s32 %s219, 1
    %s221 = scalar_select %p218, %s219, %s220
    %p224 = pneg %p218
    %p225 = scmp.eq.s32.totalorder %s15, 1
    %p226 = por %p224, %p225
    %p227 = scmp.ne.s32.totalorder %s219, %s222
    %p228 = scmp.eq.s32.totalorder %s15, 0
    %p229 = por %p227, %p228
    %p230 = scmp.ne.s32.totalorder %s219, %s222
    %p231 = scmp.eq.s32.totalorder %s20, 1
    %p232 = por %p230, %p231
    %p233 = scmp.ne.s32.totalorder %s222, %s223
    %p234 = scmp.eq.s32.totalorder %s20, 0
    %p235 = por %p233, %p234
    %p236 = scmp.ne.s32.totalorder %s222, %s223
    %p237 = scmp.eq.s32.totalorder %s21, 1
    %p238 = por %p236, %p237
    %p240 = scmp.ne.s32.totalorder %s223, %s239
    %p241 = scmp.eq.s32.totalorder %s21, 0
    %p242 = por %p240, %p241
    %p243 = scmp.le.s32.totalorder 1, %s15
    %p244 = scmp.lt.s32.totalorder %s15, 3
    %p245 = pnand %p243, %p244
    %p246 = pneg %p245
    // Predicated region
    $region9: #{tpu_custom_call.1} parent=5 // pred_check
      _
    $region10: #{tpu_custom_call.1} parent=5 // pred_check_branch
      %248 = sbr.rel (%p245) target = $region12
    $region11: #{tpu_custom_call.1} parent=5 // pred_region
      %s249 = ssub.s32 %s15, 1
      // Predicated region
      $region13: #{tpu_custom_call.1} parent=11 // pred_check
        %p250 = pneg %p62
      $region14: #{tpu_custom_call.1} parent=11 // pred_check_branch
        %252 = sbr.rel (%p250) target = $region16
      $region15: #{tpu_custom_call.1} parent=11 // pred_region
        _
      $region16: #{tpu_custom_call.1} parent=11 // pred_fallthru
        _
      // Predicated region
      $region17: #{tpu_custom_call.1} parent=11 // pred_check
        %p253 = pneg %p83
      $region18: #{tpu_custom_call.1} parent=11 // pred_check_branch
        %255 = sbr.rel (%p253) target = $region20
      $region19: #{tpu_custom_call.1} parent=11 // pred_region
        _
      $region20: #{tpu_custom_call.1} parent=11 // pred_fallthru
        _
      // Predicated region
      $region21: #{tpu_custom_call.1} parent=11 // pred_check
        %p256 = pneg %p104
      $region22: #{tpu_custom_call.1} parent=11 // pred_check_branch
        %258 = sbr.rel (%p256) target = $region24
      $region23: #{tpu_custom_call.1} parent=11 // pred_region
        _
      $region24: #{tpu_custom_call.1} parent=11 // pred_fallthru
        _
      // Predicated region
      $region25: #{tpu_custom_call.1} parent=11 // pred_check
        %p259 = pneg %p125
      $region26: #{tpu_custom_call.1} parent=11 // pred_check_branch
        %261 = sbr.rel (%p259) target = $region28
      $region27: #{tpu_custom_call.1} parent=11 // pred_region
        _
      $region28: #{tpu_custom_call.1} parent=11 // pred_fallthru
        _
      // Predicated region
      $region29: #{tpu_custom_call.1} parent=11 // pred_check
        %p262 = pneg %p146
      $region30: #{tpu_custom_call.1} parent=11 // pred_check_branch
        %264 = sbr.rel (%p262) target = $region32
      $region31: #{tpu_custom_call.1} parent=11 // pred_region
        _
      $region32: #{tpu_custom_call.1} parent=11 // pred_fallthru
        _
      // Predicated region
      $region33: #{tpu_custom_call.1} parent=11 // pred_check
        %p265 = pneg %p167
      $region34: #{tpu_custom_call.1} parent=11 // pred_check_branch
        %267 = sbr.rel (%p265) target = $region36
      $region35: #{tpu_custom_call.1} parent=11 // pred_region
        _
      $region36: #{tpu_custom_call.1} parent=11 // pred_fallthru
        _
      // Predicated region
      $region37: #{tpu_custom_call.1} parent=11 // pred_check
        %p268 = pneg %p188
      $region38: #{tpu_custom_call.1} parent=11 // pred_check_branch
        %270 = sbr.rel (%p268) target = $region40
      $region39: #{tpu_custom_call.1} parent=11 // pred_region
        _
      $region40: #{tpu_custom_call.1} parent=11 // pred_fallthru
        _
      // Predicated region
      $region41: #{tpu_custom_call.1} parent=11 // pred_check
        %p271 = pneg %p209
      $region42: #{tpu_custom_call.1} parent=11 // pred_check_branch
        %273 = sbr.rel (%p271) target = $region44
      $region43: #{tpu_custom_call.1} parent=11 // pred_region
        _
      $region44: #{tpu_custom_call.1} parent=11 // pred_fallthru
        _
    $region12: #{tpu_custom_call.1} parent=5 // pred_fallthru
      _
    %p274 = scmp.lt.s32.totalorder %s15, 2
    // Predicated region
    $region45: #{tpu_custom_call.1} parent=5 // pred_check
      %p275 = pneg %p274
    $region46: #{tpu_custom_call.1} parent=5 // pred_check_branch
      %277 = sbr.rel (%p275) target = $region48
    $region47: #{tpu_custom_call.1} parent=5 // pred_region
      // Predicated region
      $region49: #{tpu_custom_call.1} parent=47 // pred_check
        %p278 = pneg %p35
      $region50: #{tpu_custom_call.1} parent=47 // pred_check_branch
        %280 = sbr.rel (%p278) target = $region52
      $region51: #{tpu_custom_call.1} parent=47 // pred_region
        %p281 = scmp.lt.s32.totalorder %s15, 1
        %s282 = scalar_select %p281, %s15, 1
        %s283 = smul.addr %s282, 32
        %s284 = smul.addr %s283, 8
        %s285 = scalar_lea.vmem %s0, %s284
      $region52: #{tpu_custom_call.1} parent=47 // pred_fallthru
        _
    $region48: #{tpu_custom_call.1} parent=5 // pred_fallthru
      _
    %p286 = scmp.le.s32.totalorder 1, %s15
    %p287 = scmp.lt.s32.totalorder %s15, 3
    %p288 = pnand %p286, %p287
    %p289 = pneg %p288
    // Predicated region
    $region53: #{tpu_custom_call.1} parent=5 // pred_check
      _
    $region54: #{tpu_custom_call.1} parent=5 // pred_check_branch
      %291 = sbr.rel (%p288) target = $region56
    $region55: #{tpu_custom_call.1} parent=5 // pred_region
      %s292 = ssub.s32 %s15, 1
      %p293 = scmp.lt.s32.totalorder %s20, 1
      %s294 = scalar_select %p293, %s20, 1
      %s295 = smul.addr %s294, 32
      %s296 = smul.addr %s295, 8
      %s297 = scalar_lea.vmem %s0, %s296
      %p298 = pneg %p41
      %p299 = pneg %p38
      %p300 = pneg %p62
      %p301 = pneg %p59
      %p302 = pneg %p83
      %p303 = pneg %p80
      %p304 = pneg %p104
      %p305 = pneg %p101
      %p306 = pneg %p125
      %p307 = pneg %p122
      %p308 = pneg %p146
      %p309 = pneg %p143
      %p310 = pneg %p167
      %p311 = pneg %p164
      %p312 = pneg %p188
      %p313 = pneg %p185
      %p314 = pneg %p209
      %p315 = pneg %p206
      %p316 = pneg %p235
      %p317 = pneg %p232
      %p318 = scmp.lt.s32.totalorder %s20, 1
      %s319 = scalar_select %p318, %s20, 1
      %s320 = smul.addr %s319, 8
      %s321 = smul.addr %s320, 8
      %s322 = scalar_lea.vmem %s9, %s321
      %p323 = scmp.lt.s32.totalorder %s20, 1
      %s324 = scalar_select %p323, %s20, 1
      %s325 = smul.addr %s324, 32
      %s326 = smul.addr %s325, 8
      %s327 = scalar_lea.vmem %s0, %s326
      %p328 = scmp.lt.s32.totalorder %s20, 1
      %s329 = scalar_select %p328, %s20, 1
      %s330 = smul.addr %s329, 8
      %s331 = smul.addr %s330, 8
      %s332 = scalar_lea.vmem %s9, %s331
      %v333 = vld [vmem:[%s327] sm:$0xff]
      %v334 = vld [vmem:[%s327 + $0x8] sm:$0xff]
      %v335 = vld [vmem:[%s327 + $0x10] sm:$0xff]
      %v336 = vld [vmem:[%s327 + $0x18] sm:$0xff]
      %v337 = vld [vmem:[%s327 + $0x20] sm:$0xff]
      %v338 = vld [vmem:[%s327 + $0x28] sm:$0xff]
      %v339 = vld [vmem:[%s327 + $0x30] sm:$0xff]
      %v340 = vld [vmem:[%s327 + $0x38] sm:$0xff]
      %v341 = vld [vmem:[%s327 + $0x40] sm:$0xff]
      %v342 = vld [vmem:[%s327 + $0x48] sm:$0xff]
      %v343 = vld [vmem:[%s327 + $0x50] sm:$0xff]
      %v344 = vld [vmem:[%s327 + $0x58] sm:$0xff]
      %v345 = vld [vmem:[%s327 + $0x60] sm:$0xff]
      %v346 = vld [vmem:[%s327 + $0x68] sm:$0xff]
      %v347 = vld [vmem:[%s327 + $0x70] sm:$0xff]
      %v348 = vld [vmem:[%s327 + $0x78] sm:$0xff]
      %v349 = vld [vmem:[%s327 + $0x80] sm:$0xff]
      %v350 = vld [vmem:[%s327 + $0x88] sm:$0xff]
      %v351 = vld [vmem:[%s327 + $0x90] sm:$0xff]
      %v352 = vld [vmem:[%s327 + $0x98] sm:$0xff]
      %v353 = vld [vmem:[%s327 + $0xa0] sm:$0xff]
      %v354 = vld [vmem:[%s327 + $0xa8] sm:$0xff]
      %v355 = vld [vmem:[%s327 + $0xb0] sm:$0xff]
      %v356 = vld [vmem:[%s327 + $0xb8] sm:$0xff]
      %v357 = vld [vmem:[%s327 + $0xc0] sm:$0xff]
      %v358 = vld [vmem:[%s327 + $0xc8] sm:$0xff]
      %v359 = vld [vmem:[%s327 + $0xd0] sm:$0xff]
      %v360 = vld [vmem:[%s327 + $0xd8] sm:$0xff]
      %v361 = vld [vmem:[%s327 + $0xe0] sm:$0xff]
      %v362 = vld [vmem:[%s327 + $0xe8] sm:$0xff]
      %v363 = vld [vmem:[%s327 + $0xf0] sm:$0xff]
      %v364 = vld [vmem:[%s327 + $0xf8] sm:$0xff]
      %v365 = vld [vmem:[%s1] sm:$0xf]
      %v366 = vld [vmem:[%s2] sm:$0x1]
      %v368 = vlaneseq
      %v369 = vshrl.u32 %v368, 7
      %v370 = vsub.s32 0, %v369
      %v371 = vrot.slane %v366, %v370
      %vm373 = vcmask 31744
      %v375 = vsel %vm373, %v333, 0
      %v378 = vsel %vm373, %v334, 0
      %v381 = vsel %vm373, %v335, 0
      %v384 = vsel %vm373, %v336, 0
      %v387 = vsel %vm373, %v337, 0
      %v390 = vsel %vm373, %v338, 0
      %v393 = vsel %vm373, %v339, 0
      %v396 = vsel %vm373, %v340, 0
      %v399 = vsel %vm373, %v341, 0
      %v402 = vsel %vm373, %v342, 0
      %v405 = vsel %vm373, %v343, 0
      %v408 = vsel %vm373, %v344, 0
      %v411 = vsel %vm373, %v345, 0
      %v414 = vsel %vm373, %v346, 0
      %v417 = vsel %vm373, %v347, 0
      %v420 = vsel %vm373, %v348, 0
      %v423 = vsel %vm373, %v349, 0
      %v426 = vsel %vm373, %v350, 0
      %v429 = vsel %vm373, %v351, 0
      %v432 = vsel %vm373, %v352, 0
      %v435 = vsel %vm373, %v353, 0
      %v438 = vsel %vm373, %v354, 0
      %v441 = vsel %vm373, %v355, 0
      %v444 = vsel %vm373, %v356, 0
      %v447 = vsel %vm373, %v357, 0
      %v450 = vsel %vm373, %v358, 0
      %v453 = vsel %vm373, %v359, 0
      %v456 = vsel %vm373, %v360, 0
      %v459 = vsel %vm373, %v361, 0
      %v462 = vsel %vm373, %v362, 0
      %v465 = vsel %vm373, %v363, 0
      %v468 = vsel %vm373, %v364, 0
      %vm470 = vcmask 1043456
      %v472 = vsel %vm470, %v365, 0
      %474 = vmatprep.subr.mxu0 0.0
      %475 = vmatpush1.msra.mxu0 0.0
      %476 = vmatprep.subr.mxu0 0.0
      %477 = vmatpush1.msra.mxu0 0.0
      %478 = vmatprep.subr.mxu0 0.0
      %479 = vmatpush1.msra.mxu0 0.0
      %480 = vmatprep.subr.mxu0 0.0
      %481 = vmatpush1.msra.mxu0 0.0
      %482 = vmatprep.subr.mxu0 0.0
      %483 = vmatpush1.msra.mxu0 0.0
      %484 = vmatprep.subr.mxu0 0.0
      %485 = vmatpush1.msra.mxu0 0.0
      %486 = vmatprep.subr.mxu0 0.0
      %487 = vmatpush1.msra.mxu0 0.0
      %488 = vmatprep.subr.mxu0 0.0
      %489 = vmatpush1.msra.mxu0 0.0
      %490 = vmatprep.subr.mxu0 0.0
      %491 = vmatpush1.msra.mxu0 0.0
      %492 = vmatprep.subr.mxu0 0.0
      %493 = vmatpush1.msra.mxu0 0.0
      %494 = vmatprep.subr.mxu0 0.0
      %495 = vmatpush1.msra.mxu0 0.0
      %496 = vmatprep.subr.mxu0 0.0
      %497 = vmatpush1.msra.mxu0 0.0
      %498 = vmatprep.subr.mxu0 0.0
      %499 = vmatpush1.msra.mxu0 0.0
      %500 = vmatprep.subr.mxu0 0.0
      %501 = vmatpush1.msra.mxu0 0.0
      %502 = vmatprep.subr.mxu0 0.0
      %503 = vmatpush1.msra.mxu0 0.0
      %504 = vmatprep.subr.mxu0 0.0
      %505 = vmatpush1.msra.mxu0 %v472
      %506 = vmatprep.subr.mxu0 0.0
      %507 = vmatpush2.msra.mxu0 0.0
      %508 = vmatprep.subr.mxu0 0.0
      %509 = vmatpush2.msra.mxu0 0.0
      %510 = vmatprep.subr.mxu0 0.0
      %511 = vmatpush2.msra.mxu0 0.0
      %512 = vmatprep.subr.mxu0 0.0
      %513 = vmatpush2.msra.mxu0 0.0
      %514 = vmatprep.subr.mxu0 0.0
      %515 = vmatpush2.msra.mxu0 0.0
      %516 = vmatprep.subr.mxu0 0.0
      %517 = vmatpush2.msra.mxu0 0.0
      %518 = vmatprep.subr.mxu0 0.0
      %519 = vmatpush2.msra.mxu0 0.0
      %520 = vmatprep.subr.mxu0 0.0
      %521 = vmatpush2.msra.mxu0 0.0
      %522 = vmatprep.subr.mxu0 0.0
      %523 = vmatpush2.msra.mxu0 0.0
      %524 = vmatprep.subr.mxu0 0.0
      %525 = vmatpush2.msra.mxu0 0.0
      %526 = vmatprep.subr.mxu0 0.0
      %527 = vmatpush2.msra.mxu0 0.0
      %528 = vmatprep.subr.mxu0 0.0
      %529 = vmatpush2.msra.mxu0 0.0
      %530 = vmatprep.subr.mxu0 0.0
      %531 = vmatpush2.msra.mxu0 0.0
      %532 = vmatprep.subr.mxu0 0.0
      %533 = vmatpush2.msra.mxu0 0.0
      %534 = vmatprep.subr.mxu0 0.0
      %535 = vmatpush2.msra.mxu0 0.0
      %536 = vmatprep.subr.mxu0 0.0
      %537 = vmatpush2.msra.mxu0 0.0
      %538 = vmatprep.mubr.f32.mxu0 0.0
      %539 = vmatmul.mubr.f32.gmra.mxu0 %v375
      %v540 = vpop.f32.mrf.mxu0
      %v541 = vadd.f32 %v371, %v540
      %v542 = vpop.f32.mrf.mxu0
      %543 = vmatprep.mubr.f32.mxu0 0.0
      %544 = vmatmul.mubr.f32.gmra.mxu0 %v378
      %v545 = vpop.f32.mrf.mxu0
      %v546 = vadd.f32 %v371, %v545
      %v547 = vpop.f32.mrf.mxu0
      %548 = vmatprep.mubr.f32.mxu0 0.0
      %549 = vmatmul.mubr.f32.gmra.mxu0 %v381
      %v550 = vpop.f32.mrf.mxu0
      %v551 = vadd.f32 %v371, %v550
      %v552 = vpop.f32.mrf.mxu0
      %553 = vmatprep.mubr.f32.mxu0 0.0
      %554 = vmatmul.mubr.f32.gmra.mxu0 %v384
      %v555 = vpop.f32.mrf.mxu0
      %v556 = vadd.f32 %v371, %v555
      %v557 = vpop.f32.mrf.mxu0
      %558 = vmatprep.mubr.f32.mxu0 0.0
      %559 = vmatmul.mubr.f32.gmra.mxu0 %v387
      %v560 = vpop.f32.mrf.mxu0
      %v561 = vadd.f32 %v371, %v560
      %v562 = vpop.f32.mrf.mxu0
      %563 = vmatprep.mubr.f32.mxu0 0.0
      %564 = vmatmul.mubr.f32.gmra.mxu0 %v390
      %v565 = vpop.f32.mrf.mxu0
      %v566 = vadd.f32 %v371, %v565
      %v567 = vpop.f32.mrf.mxu0
      %568 = vmatprep.mubr.f32.mxu0 0.0
      %569 = vmatmul.mubr.f32.gmra.mxu0 %v393
      %v570 = vpop.f32.mrf.mxu0
      %v571 = vadd.f32 %v371, %v570
      %v572 = vpop.f32.mrf.mxu0
      %573 = vmatprep.mubr.f32.mxu0 0.0
      %574 = vmatmul.mubr.f32.gmra.mxu0 %v396
      %v575 = vpop.f32.mrf.mxu0
      %v576 = vadd.f32 %v371, %v575
      %v577 = vpop.f32.mrf.mxu0
      %578 = vmatprep.mubr.f32.mxu0 0.0
      %579 = vmatmul.mubr.f32.gmra.mxu0 %v399
      %v580 = vpop.f32.mrf.mxu0
      %v581 = vadd.f32 %v371, %v580
      %v582 = vpop.f32.mrf.mxu0
      %583 = vmatprep.mubr.f32.mxu0 0.0
      %584 = vmatmul.mubr.f32.gmra.mxu0 %v402
      %v585 = vpop.f32.mrf.mxu0
      %v586 = vadd.f32 %v371, %v585
      %v587 = vpop.f32.mrf.mxu0
      %588 = vmatprep.mubr.f32.mxu0 0.0
      %589 = vmatmul.mubr.f32.gmra.mxu0 %v405
      %v590 = vpop.f32.mrf.mxu0
      %v591 = vadd.f32 %v371, %v590
      %v592 = vpop.f32.mrf.mxu0
      %593 = vmatprep.mubr.f32.mxu0 0.0
      %594 = vmatmul.mubr.f32.gmra.mxu0 %v408
      %v595 = vpop.f32.mrf.mxu0
      %v596 = vadd.f32 %v371, %v595
      %v597 = vpop.f32.mrf.mxu0
      %598 = vmatprep.mubr.f32.mxu0 0.0
      %599 = vmatmul.mubr.f32.gmra.mxu0 %v411
      %v600 = vpop.f32.mrf.mxu0
      %v601 = vadd.f32 %v371, %v600
      %v602 = vpop.f32.mrf.mxu0
      %603 = vmatprep.mubr.f32.mxu0 0.0
      %604 = vmatmul.mubr.f32.gmra.mxu0 %v414
      %v605 = vpop.f32.mrf.mxu0
      %v606 = vadd.f32 %v371, %v605
      %v607 = vpop.f32.mrf.mxu0
      %608 = vmatprep.mubr.f32.mxu0 0.0
      %609 = vmatmul.mubr.f32.gmra.mxu0 %v417
      %v610 = vpop.f32.mrf.mxu0
      %v611 = vadd.f32 %v371, %v610
      %v612 = vpop.f32.mrf.mxu0
      %613 = vmatprep.mubr.f32.mxu0 0.0
      %614 = vmatmul.mubr.f32.gmra.mxu0 %v420
      %v615 = vpop.f32.mrf.mxu0
      %v616 = vadd.f32 %v371, %v615
      %v617 = vpop.f32.mrf.mxu0
      %618 = vmatprep.mubr.f32.mxu0 0.0
      %619 = vmatmul.mubr.f32.gmra.mxu0 %v423
      %v620 = vpop.f32.mrf.mxu0
      %v621 = vadd.f32 %v371, %v620
      %v622 = vpop.f32.mrf.mxu0
      %623 = vmatprep.mubr.f32.mxu0 0.0
      %624 = vmatmul.mubr.f32.gmra.mxu0 %v426
      %v625 = vpop.f32.mrf.mxu0
      %v626 = vadd.f32 %v371, %v625
      %v627 = vpop.f32.mrf.mxu0
      %628 = vmatprep.mubr.f32.mxu0 0.0
      %629 = vmatmul.mubr.f32.gmra.mxu0 %v429
      %v630 = vpop.f32.mrf.mxu0
      %v631 = vadd.f32 %v371, %v630
      %v632 = vpop.f32.mrf.mxu0
      %633 = vmatprep.mubr.f32.mxu0 0.0
      %634 = vmatmul.mubr.f32.gmra.mxu0 %v432
      %v635 = vpop.f32.mrf.mxu0
      %v636 = vadd.f32 %v371, %v635
      %v637 = vpop.f32.mrf.mxu0
      %638 = vmatprep.mubr.f32.mxu0 0.0
      %639 = vmatmul.mubr.f32.gmra.mxu0 %v435
      %v640 = vpop.f32.mrf.mxu0
      %v641 = vadd.f32 %v371, %v640
      %v642 = vpop.f32.mrf.mxu0
      %643 = vmatprep.mubr.f32.mxu0 0.0
      %644 = vmatmul.mubr.f32.gmra.mxu0 %v438
      %v645 = vpop.f32.mrf.mxu0
      %v646 = vadd.f32 %v371, %v645
      %v647 = vpop.f32.mrf.mxu0
      %648 = vmatprep.mubr.f32.mxu0 0.0
      %649 = vmatmul.mubr.f32.gmra.mxu0 %v441
      %v650 = vpop.f32.mrf.mxu0
      %v651 = vadd.f32 %v371, %v650
      %v652 = vpop.f32.mrf.mxu0
      %653 = vmatprep.mubr.f32.mxu0 0.0
      %654 = vmatmul.mubr.f32.gmra.mxu0 %v444
      %v655 = vpop.f32.mrf.mxu0
      %v656 = vadd.f32 %v371, %v655
      %v657 = vpop.f32.mrf.mxu0
      %658 = vmatprep.mubr.f32.mxu0 0.0
      %659 = vmatmul.mubr.f32.gmra.mxu0 %v447
      %v660 = vpop.f32.mrf.mxu0
      %v661 = vadd.f32 %v371, %v660
      %v662 = vpop.f32.mrf.mxu0
      %663 = vmatprep.mubr.f32.mxu0 0.0
      %664 = vmatmul.mubr.f32.gmra.mxu0 %v450
      %v665 = vpop.f32.mrf.mxu0
      %v666 = vadd.f32 %v371, %v665
      %v667 = vpop.f32.mrf.mxu0
      %668 = vmatprep.mubr.f32.mxu0 0.0
      %669 = vmatmul.mubr.f32.gmra.mxu0 %v453
      %v670 = vpop.f32.mrf.mxu0
      %v671 = vadd.f32 %v371, %v670
      %v672 = vpop.f32.mrf.mxu0
      %673 = vmatprep.mubr.f32.mxu0 0.0
      %674 = vmatmul.mubr.f32.gmra.mxu0 %v456
      %v675 = vpop.f32.mrf.mxu0
      %v676 = vadd.f32 %v371, %v675
      %v677 = vpop.f32.mrf.mxu0
      %678 = vmatprep.mubr.f32.mxu0 0.0
      %679 = vmatmul.mubr.f32.gmra.mxu0 %v459
      %v680 = vpop.f32.mrf.mxu0
      %v681 = vadd.f32 %v371, %v680
      %v682 = vpop.f32.mrf.mxu0
      %683 = vmatprep.mubr.f32.mxu0 0.0
      %684 = vmatmul.mubr.f32.gmra.mxu0 %v462
      %v685 = vpop.f32.mrf.mxu0
      %v686 = vadd.f32 %v371, %v685
      %v687 = vpop.f32.mrf.mxu0
      %688 = vmatprep.mubr.f32.mxu0 0.0
      %689 = vmatmul.mubr.f32.gmra.mxu0 %v465
      %v690 = vpop.f32.mrf.mxu0
      %v691 = vadd.f32 %v371, %v690
      %v692 = vpop.f32.mrf.mxu0
      %693 = vmatprep.mubr.f32.mxu0 0.0
      %694 = vmatmul.mubr.f32.gmra.mxu0 %v468
      %v695 = vpop.f32.mrf.mxu0
      %v696 = vadd.f32 %v371, %v695
      %v697 = vpop.f32.mrf.mxu0
      %698 = vdwg.mxu0
      %vm699 = vcmp.ge.f32.partialorder %v541, 0.0
      %vm700 = vcmp.ge.f32.partialorder %v546, 0.0
      %vm701 = vcmp.ge.f32.partialorder %v551, 0.0
      %vm702 = vcmp.ge.f32.partialorder %v556, 0.0
      %vm703 = vcmp.ge.f32.partialorder %v561, 0.0
      %vm704 = vcmp.ge.f32.partialorder %v566, 0.0
      %vm705 = vcmp.ge.f32.partialorder %v571, 0.0
      %vm706 = vcmp.ge.f32.partialorder %v576, 0.0
      %vm707 = vcmp.ge.f32.partialorder %v581, 0.0
      %vm708 = vcmp.ge.f32.partialorder %v586, 0.0
      %vm709 = vcmp.ge.f32.partialorder %v591, 0.0
      %vm710 = vcmp.ge.f32.partialorder %v596, 0.0
      %vm711 = vcmp.ge.f32.partialorder %v601, 0.0
      %vm712 = vcmp.ge.f32.partialorder %v606, 0.0
      %vm713 = vcmp.ge.f32.partialorder %v611, 0.0
      %vm714 = vcmp.ge.f32.partialorder %v616, 0.0
      %vm715 = vcmp.ge.f32.partialorder %v621, 0.0
      %vm716 = vcmp.ge.f32.partialorder %v626, 0.0
      %vm717 = vcmp.ge.f32.partialorder %v631, 0.0
      %vm718 = vcmp.ge.f32.partialorder %v636, 0.0
      %vm719 = vcmp.ge.f32.partialorder %v641, 0.0
      %vm720 = vcmp.ge.f32.partialorder %v646, 0.0
      %vm721 = vcmp.ge.f32.partialorder %v651, 0.0
      %vm722 = vcmp.ge.f32.partialorder %v656, 0.0
      %vm723 = vcmp.ge.f32.partialorder %v661, 0.0
      %vm724 = vcmp.ge.f32.partialorder %v666, 0.0
      %vm725 = vcmp.ge.f32.partialorder %v671, 0.0
      %vm726 = vcmp.ge.f32.partialorder %v676, 0.0
      %vm727 = vcmp.ge.f32.partialorder %v681, 0.0
      %vm728 = vcmp.ge.f32.partialorder %v686, 0.0
      %vm729 = vcmp.ge.f32.partialorder %v691, 0.0
      %vm730 = vcmp.ge.f32.partialorder %v696, 0.0
      %v731 = vld [vmem:[%s3] sm:$0x1]
      %v733 = vlaneseq
      %v734 = vshrl.u32 %v733, 7
      %v735 = vsub.s32 0, %v734
      %v736 = vrot.slane %v731, %v735
      %v738 = vmul.f32 %v541, %v736
      %v739 = vmul.f32 %v546, %v736
      %v740 = vmul.f32 %v551, %v736
      %v741 = vmul.f32 %v556, %v736
      %v742 = vmul.f32 %v561, %v736
      %v743 = vmul.f32 %v566, %v736
      %v744 = vmul.f32 %v571, %v736
      %v745 = vmul.f32 %v576, %v736
      %v746 = vmul.f32 %v581, %v736
      %v747 = vmul.f32 %v586, %v736
      %v748 = vmul.f32 %v591, %v736
      %v749 = vmul.f32 %v596, %v736
      %v750 = vmul.f32 %v601, %v736
      %v751 = vmul.f32 %v606, %v736
      %v752 = vmul.f32 %v611, %v736
      %v753 = vmul.f32 %v616, %v736
      %v754 = vmul.f32 %v621, %v736
      %v755 = vmul.f32 %v626, %v736
      %v756 = vmul.f32 %v631, %v736
      %v757 = vmul.f32 %v636, %v736
      %v758 = vmul.f32 %v641, %v736
      %v759 = vmul.f32 %v646, %v736
      %v760 = vmul.f32 %v651, %v736
      %v761 = vmul.f32 %v656, %v736
      %v762 = vmul.f32 %v661, %v736
      %v763 = vmul.f32 %v666, %v736
      %v764 = vmul.f32 %v671, %v736
      %v765 = vmul.f32 %v676, %v736
      %v766 = vmul.f32 %v681, %v736
      %v767 = vmul.f32 %v686, %v736
      %v768 = vmul.f32 %v691, %v736
      %v769 = vmul.f32 %v696, %v736
      %v770 = vsel %vm699, %v541, %v738
      %v771 = vsel %vm700, %v546, %v739
      %v772 = vsel %vm701, %v551, %v740
      %v773 = vsel %vm702, %v556, %v741
      %v774 = vsel %vm703, %v561, %v742
      %v775 = vsel %vm704, %v566, %v743
      %v776 = vsel %vm705, %v571, %v744
      %v777 = vsel %vm706, %v576, %v745
      %v778 = vsel %vm707, %v581, %v746
      %v779 = vsel %vm708, %v586, %v747
      %v780 = vsel %vm709, %v591, %v748
      %v781 = vsel %vm710, %v596, %v749
      %v782 = vsel %vm711, %v601, %v750
      %v783 = vsel %vm712, %v606, %v751
      %v784 = vsel %vm713, %v611, %v752
      %v785 = vsel %vm714, %v616, %v753
      %v786 = vsel %vm715, %v621, %v754
      %v787 = vsel %vm716, %v626, %v755
      %v788 = vsel %vm717, %v631, %v756
      %v789 = vsel %vm718, %v636, %v757
      %v790 = vsel %vm719, %v641, %v758
      %v791 = vsel %vm720, %v646, %v759
      %v792 = vsel %vm721, %v651, %v760
      %v793 = vsel %vm722, %v656, %v761
      %v794 = vsel %vm723, %v661, %v762
      %v795 = vsel %vm724, %v666, %v763
      %v796 = vsel %vm725, %v671, %v764
      %v797 = vsel %vm726, %v676, %v765
      %v798 = vsel %vm727, %v681, %v766
      %v799 = vsel %vm728, %v686, %v767
      %v800 = vsel %vm729, %v691, %v768
      %v801 = vsel %vm730, %v696, %v769
      %vm818 = vcmask 1040384
      %v819 = vrot.slane %v770, 7
      %v820 = vrot.slane %v771, 7
      %v821 = vsel %vm818, %v819, %v820
      %v822 = vrot.slane %v772, 7
      %v823 = vsel %vm818, %v820, %v822
      %v824 = vrot.slane %v773, 7
      %v825 = vsel %vm818, %v822, %v824
      %v826 = vrot.slane %v774, 7
      %v827 = vsel %vm818, %v824, %v826
      %v828 = vrot.slane %v775, 7
      %v829 = vsel %vm818, %v826, %v828
      %v830 = vrot.slane %v776, 7
      %v831 = vsel %vm818, %v828, %v830
      %v832 = vrot.slane %v777, 7
      %v833 = vsel %vm818, %v830, %v832
      %v834 = vrot.slane %v778, 7
      %v835 = vsel %vm818, %v832, %v834
      %v836 = vrot.slane %v779, 7
      %v837 = vsel %vm818, %v834, %v836
      %v838 = vrot.slane %v780, 7
      %v839 = vsel %vm818, %v836, %v838
      %v840 = vrot.slane %v781, 7
      %v841 = vsel %vm818, %v838, %v840
      %v842 = vrot.slane %v782, 7
      %v843 = vsel %vm818, %v840, %v842
      %v844 = vrot.slane %v783, 7
      %v845 = vsel %vm818, %v842, %v844
      %v846 = vrot.slane %v784, 7
      %v847 = vsel %vm818, %v844, %v846
      %v848 = vrot.slane %v785, 7
      %v849 = vsel %vm818, %v846, %v848
      %v867 = vsel %vm818, 0.0, %v819
      %v868 = vsel %vm818, %v848, 0.0
      %v885 = vrot.slane %v786, 7
      %v886 = vrot.slane %v787, 7
      %v887 = vsel %vm818, %v885, %v886
      %v888 = vrot.slane %v788, 7
      %v889 = vsel %vm818, %v886, %v888
      %v890 = vrot.slane %v789, 7
      %v891 = vsel %vm818, %v888, %v890
      %v892 = vrot.slane %v790, 7
      %v893 = vsel %vm818, %v890, %v892
      %v894 = vrot.slane %v791, 7
      %v895 = vsel %vm818, %v892, %v894
      %v896 = vrot.slane %v792, 7
      %v897 = vsel %vm818, %v894, %v896
      %v898 = vrot.slane %v793, 7
      %v899 = vsel %vm818, %v896, %v898
      %v900 = vrot.slane %v794, 7
      %v901 = vsel %vm818, %v898, %v900
      %v902 = vrot.slane %v795, 7
      %v903 = vsel %vm818, %v900, %v902
      %v904 = vrot.slane %v796, 7
      %v905 = vsel %vm818, %v902, %v904
      %v906 = vrot.slane %v797, 7
      %v907 = vsel %vm818, %v904, %v906
      %v908 = vrot.slane %v798, 7
      %v909 = vsel %vm818, %v906, %v908
      %v910 = vrot.slane %v799, 7
      %v911 = vsel %vm818, %v908, %v910
      %v912 = vrot.slane %v800, 7
      %v913 = vsel %vm818, %v910, %v912
      %v914 = vrot.slane %v801, 7
      %v915 = vsel %vm818, %v912, %v914
      %v933 = vsel %vm818, 0.0, %v885
      %v934 = vsel %vm818, %v914, 0.0
      %v935 = vlaneseq
      %v936 = vshrl.u32 %v935, 7
      %v937 = vadd.s32 %v936, 16
      %v938 = vadd.s32 %v936, 32
      %v939 = vadd.s32 %v936, 48
      %v940 = vadd.s32 %v936, 64
      %v941 = vadd.s32 %v936, 80
      %v942 = vadd.s32 %v936, 96
      %v943 = vadd.s32 %v936, 112
      %vm944 = vcmp.lt.s32.totalorder %v936, 0
      %v945 = vsub.s32 0, %v936
      %v946 = vsel %vm944, %v945, %v936
      %v947 = vshrl.u32 %v946, 3
      %v948 = vand.u32 %v946, 7
      %v949 = vsub.s32 0, %v948
      %v950 = vsel %vm944, %v949, %v948
      %vm951 = vcmp.lt.s32.totalorder %v937, 0
      %v952 = vsub.s32 0, %v937
      %v953 = vsel %vm951, %v952, %v937
      %v954 = vshrl.u32 %v953, 3
      %v955 = vand.u32 %v953, 7
      %v956 = vsub.s32 0, %v955
      %v957 = vsel %vm951, %v956, %v955
      %vm958 = vcmp.lt.s32.totalorder %v938, 0
      %v959 = vsub.s32 0, %v938
      %v960 = vsel %vm958, %v959, %v938
      %v961 = vshrl.u32 %v960, 3
      %v962 = vand.u32 %v960, 7
      %v963 = vsub.s32 0, %v962
      %v964 = vsel %vm958, %v963, %v962
      %vm965 = vcmp.lt.s32.totalorder %v939, 0
      %v966 = vsub.s32 0, %v939
      %v967 = vsel %vm965, %v966, %v939
      %v968 = vshrl.u32 %v967, 3
      %v969 = vand.u32 %v967, 7
      %v970 = vsub.s32 0, %v969
      %v971 = vsel %vm965, %v970, %v969
      %vm972 = vcmp.lt.s32.totalorder %v940, 0
      %v973 = vsub.s32 0, %v940
      %v974 = vsel %vm972, %v973, %v940
      %v975 = vshrl.u32 %v974, 3
      %v976 = vand.u32 %v974, 7
      %v977 = vsub.s32 0, %v976
      %v978 = vsel %vm972, %v977, %v976
      %vm979 = vcmp.lt.s32.totalorder %v941, 0
      %v980 = vsub.s32 0, %v941
      %v981 = vsel %vm979, %v980, %v941
      %v982 = vshrl.u32 %v981, 3
      %v983 = vand.u32 %v981, 7
      %v984 = vsub.s32 0, %v983
      %v985 = vsel %vm979, %v984, %v983
      %vm986 = vcmp.lt.s32.totalorder %v942, 0
      %v987 = vsub.s32 0, %v942
      %v988 = vsel %vm986, %v987, %v942
      %v989 = vshrl.u32 %v988, 3
      %v990 = vand.u32 %v988, 7
      %v991 = vsub.s32 0, %v990
      %v992 = vsel %vm986, %v991, %v990
      %vm993 = vcmp.lt.s32.totalorder %v943, 0
      %v994 = vsub.s32 0, %v943
      %v995 = vsel %vm993, %v994, %v943
      %v996 = vshrl.u32 %v995, 3
      %v997 = vand.u32 %v995, 7
      %v998 = vsub.s32 0, %v997
      %v999 = vsel %vm993, %v998, %v997
      %vm1000 = vcmp.ne.s32.totalorder %v950, 0
      %vm1001 = vcmp.ne.s32.totalorder %v957, 0
      %vm1002 = vcmp.ne.s32.totalorder %v964, 0
      %vm1003 = vcmp.ne.s32.totalorder %v971, 0
      %vm1004 = vcmp.ne.s32.totalorder %v978, 0
      %vm1005 = vcmp.ne.s32.totalorder %v985, 0
      %vm1006 = vcmp.ne.s32.totalorder %v992, 0
      %vm1007 = vcmp.ne.s32.totalorder %v999, 0
      %vm1008 = vcmp.lt.s32.totalorder %v950, 0
      %vm1009 = vcmp.lt.s32.totalorder %v957, 0
      %vm1010 = vcmp.lt.s32.totalorder %v964, 0
      %vm1011 = vcmp.lt.s32.totalorder %v971, 0
      %vm1012 = vcmp.lt.s32.totalorder %v978, 0
      %vm1013 = vcmp.lt.s32.totalorder %v985, 0
      %vm1014 = vcmp.lt.s32.totalorder %v992, 0
      %vm1015 = vcmp.lt.s32.totalorder %v999, 0
      %vm1016 = vmand %vm1008, %vm1000
      %vm1017 = vmand %vm1009, %vm1001
      %vm1018 = vmand %vm1010, %vm1002
      %vm1019 = vmand %vm1011, %vm1003
      %vm1020 = vmand %vm1012, %vm1004
      %vm1021 = vmand %vm1013, %vm1005
      %vm1022 = vmand %vm1014, %vm1006
      %vm1023 = vmand %vm1015, %vm1007
      %v1024 = vadd.s32 %v950, 8
      %v1025 = vadd.s32 %v957, 8
      %v1026 = vadd.s32 %v964, 8
      %v1027 = vadd.s32 %v971, 8
      %v1028 = vadd.s32 %v978, 8
      %v1029 = vadd.s32 %v985, 8
      %v1030 = vadd.s32 %v992, 8
      %v1031 = vadd.s32 %v999, 8
      %v1032 = vsel %vm1016, %v1024, %v950
      %v1033 = vsel %vm1017, %v1025, %v957
      %v1034 = vsel %vm1018, %v1026, %v964
      %v1035 = vsel %vm1019, %v1027, %v971
      %v1036 = vsel %vm1020, %v1028, %v978
      %v1037 = vsel %vm1021, %v1029, %v985
      %v1038 = vsel %vm1022, %v1030, %v992
      %v1039 = vsel %vm1023, %v1031, %v999
      %vm1040 = vcmp.ge.s32.totalorder %v1032, 1
      %vm1041 = vcmp.ge.s32.totalorder %v1033, 1
      %vm1042 = vcmp.ge.s32.totalorder %v1034, 1
      %vm1043 = vcmp.ge.s32.totalorder %v1035, 1
      %vm1044 = vcmp.ge.s32.totalorder %v1036, 1
      %vm1045 = vcmp.ge.s32.totalorder %v1037, 1
      %vm1046 = vcmp.ge.s32.totalorder %v1038, 1
      %vm1047 = vcmp.ge.s32.totalorder %v1039, 1
      %v1048 = vsel %vm1040, 1, 0
      %v1049 = vsel %vm1041, 1, 0
      %v1050 = vsel %vm1042, 1, 0
      %v1051 = vsel %vm1043, 1, 0
      %v1052 = vsel %vm1044, 1, 0
      %v1053 = vsel %vm1045, 1, 0
      %v1054 = vsel %vm1046, 1, 0
      %v1055 = vsel %vm1047, 1, 0
      %v1056 = vcvt.s32.f32 %v1048
      %v1057 = vcvt.s32.f32 %v1049
      %v1058 = vcvt.s32.f32 %v1050
      %v1059 = vcvt.s32.f32 %v1051
      %v1060 = vcvt.s32.f32 %v1052
      %v1061 = vcvt.s32.f32 %v1053
      %v1062 = vcvt.s32.f32 %v1054
      %v1063 = vcvt.s32.f32 %v1055
      %v1064 = vmul.f32 %v1056, 0.0
      %v1065 = vmul.f32 %v887, %v1057
      %v1066 = vmul.f32 %v891, %v1058
      %v1067 = vmul.f32 %v895, %v1059
      %v1068 = vmul.f32 %v899, %v1060
      %v1069 = vmul.f32 %v903, %v1061
      %v1070 = vmul.f32 %v907, %v1062
      %v1071 = vmul.f32 %v911, %v1063
      %v1072 = vld [vmem:[%s4] sm:$0x1]
      %v1074 = vlaneseq
      %v1075 = vshrl.u32 %v1074, 7
      %v1076 = vsub.s32 0, %v1075
      %v1077 = vrot.slane %v1072, %v1076
      %v1079 = vmul.f32 %v1064, %v1077
      %v1080 = vmul.f32 %v1065, %v1077
      %v1081 = vmul.f32 %v1066, %v1077
      %v1082 = vmul.f32 %v1067, %v1077
      %v1083 = vmul.f32 %v1068, %v1077
      %v1084 = vmul.f32 %v1069, %v1077
      %v1085 = vmul.f32 %v1070, %v1077
      %v1086 = vmul.f32 %v1071, %v1077
      %v1087 = vadd.f32 %v1079, 0.0
      %v1088 = vadd.f32 %v1080, 0.0
      %v1089 = vadd.f32 %v1081, 0.0
      %v1090 = vadd.f32 %v1082, 0.0
      %v1091 = vadd.f32 %v1083, 0.0
      %v1092 = vadd.f32 %v1084, 0.0
      %v1093 = vadd.f32 %v1085, 0.0
      %v1094 = vadd.f32 %v1086, 0.0
      %s1095 = scalar_lea.vmem %s4, 1
      %v1096 = vld [vmem:[%s1095] sm:$0x1]
      %v1098 = vlaneseq
      %v1099 = vshrl.u32 %v1098, 7
      %v1100 = vsub.s32 0, %v1099
      %v1101 = vrot.slane %v1096, %v1100
      %v1103 = vmul.f32 %v1101, 0.0
      %v1104 = vmul.f32 %v867, %v1101
      %v1105 = vmul.f32 %v821, %v1101
      %v1106 = vmul.f32 %v823, %v1101
      %v1107 = vmul.f32 %v825, %v1101
      %v1108 = vmul.f32 %v827, %v1101
      %v1109 = vmul.f32 %v829, %v1101
      %v1110 = vmul.f32 %v831, %v1101
      %v1111 = vmul.f32 %v833, %v1101
      %v1112 = vmul.f32 %v835, %v1101
      %v1113 = vmul.f32 %v837, %v1101
      %v1114 = vmul.f32 %v839, %v1101
      %v1115 = vmul.f32 %v841, %v1101
      %v1116 = vmul.f32 %v843, %v1101
      %v1117 = vmul.f32 %v845, %v1101
      %v1118 = vmul.f32 %v847, %v1101
      %vm1135 = vcmask 1046528
      %v1136 = vrot.slane %v1103, 1
      %v1137 = vrot.slane %v1104, 1
      %v1138 = vsel %vm1135, %v1136, %v1137
      %v1139 = vrot.slane %v1105, 1
      %v1140 = vrot.slane %v1106, 1
      %v1141 = vsel %vm1135, %v1139, %v1140
      %v1142 = vrot.slane %v1107, 1
      %v1143 = vrot.slane %v1108, 1
      %v1144 = vsel %vm1135, %v1142, %v1143
      %v1145 = vrot.slane %v1109, 1
      %v1146 = vrot.slane %v1110, 1
      %v1147 = vsel %vm1135, %v1145, %v1146
      %v1148 = vrot.slane %v1111, 1
      %v1149 = vrot.slane %v1112, 1
      %v1150 = vsel %vm1135, %v1148, %v1149
      %v1151 = vrot.slane %v1113, 1
      %v1152 = vrot.slane %v1114, 1
      %v1153 = vsel %vm1135, %v1151, %v1152
      %v1154 = vrot.slane %v1115, 1
      %v1155 = vrot.slane %v1116, 1
      %v1156 = vsel %vm1135, %v1154, %v1155
      %v1157 = vrot.slane %v1117, 1
      %v1158 = vrot.slane %v1118, 1
      %v1159 = vsel %vm1135, %v1157, %v1158
      %v1168 = vadd.f32 %v1087, %v1138
      %v1169 = vadd.f32 %v1088, %v1141
      %v1170 = vadd.f32 %v1089, %v1144
      %v1171 = vadd.f32 %v1090, %v1147
      %v1172 = vadd.f32 %v1091, %v1150
      %v1173 = vadd.f32 %v1092, %v1153
      %v1174 = vadd.f32 %v1093, %v1156
      %v1175 = vadd.f32 %v1094, %v1159
      %s1176 = scalar_lea.vmem %s4, 2
      %v1177 = vld [vmem:[%s1176] sm:$0x1]
      %v1179 = vlaneseq
      %v1180 = vshrl.u32 %v1179, 7
      %v1181 = vsub.s32 0, %v1180
      %v1182 = vrot.slane %v1177, %v1181
      %v1184 = vmul.f32 %v1182, 0.0
      %v1185 = vmul.f32 %v933, %v1182
      %v1186 = vmul.f32 %v887, %v1182
      %v1187 = vmul.f32 %v889, %v1182
      %v1188 = vmul.f32 %v891, %v1182
      %v1189 = vmul.f32 %v893, %v1182
      %v1190 = vmul.f32 %v895, %v1182
      %v1191 = vmul.f32 %v897, %v1182
      %v1192 = vmul.f32 %v899, %v1182
      %v1193 = vmul.f32 %v901, %v1182
      %v1194 = vmul.f32 %v903, %v1182
      %v1195 = vmul.f32 %v905, %v1182
      %v1196 = vmul.f32 %v907, %v1182
      %v1197 = vmul.f32 %v909, %v1182
      %v1198 = vmul.f32 %v911, %v1182
      %v1199 = vmul.f32 %v913, %v1182
      %v1216 = vrot.slane %v1184, 1
      %v1217 = vrot.slane %v1185, 1
      %v1218 = vsel %vm1135, %v1216, %v1217
      %v1219 = vrot.slane %v1186, 1
      %v1220 = vrot.slane %v1187, 1
      %v1221 = vsel %vm1135, %v1219, %v1220
      %v1222 = vrot.slane %v1188, 1
      %v1223 = vrot.slane %v1189, 1
      %v1224 = vsel %vm1135, %v1222, %v1223
      %v1225 = vrot.slane %v1190, 1
      %v1226 = vrot.slane %v1191, 1
      %v1227 = vsel %vm1135, %v1225, %v1226
      %v1228 = vrot.slane %v1192, 1
      %v1229 = vrot.slane %v1193, 1
      %v1230 = vsel %vm1135, %v1228, %v1229
      %v1231 = vrot.slane %v1194, 1
      %v1232 = vrot.slane %v1195, 1
      %v1233 = vsel %vm1135, %v1231, %v1232
      %v1234 = vrot.slane %v1196, 1
      %v1235 = vrot.slane %v1197, 1
      %v1236 = vsel %vm1135, %v1234, %v1235
      %v1237 = vrot.slane %v1198, 1
      %v1238 = vrot.slane %v1199, 1
      %v1239 = vsel %vm1135, %v1237, %v1238
      %v1248 = vadd.f32 %v1168, %v1218
      %v1249 = vadd.f32 %v1169, %v1221
      %v1250 = vadd.f32 %v1170, %v1224
      %v1251 = vadd.f32 %v1171, %v1227
      %v1252 = vadd.f32 %v1172, %v1230
      %v1253 = vadd.f32 %v1173, %v1233
      %v1254 = vadd.f32 %v1174, %v1236
      %v1255 = vadd.f32 %v1175, %v1239
      %v1256 = vmul.f32 %v933, %v1056
      %v1257 = vmul.f32 %v889, %v1057
      %v1258 = vmul.f32 %v893, %v1058
      %v1259 = vmul.f32 %v897, %v1059
      %v1260 = vmul.f32 %v901, %v1060
      %v1261 = vmul.f32 %v905, %v1061
      %v1262 = vmul.f32 %v909, %v1062
      %v1263 = vmul.f32 %v913, %v1063
      %s1264 = scalar_lea.vmem %s4, 3
      %v1265 = vld [vmem:[%s1264] sm:$0x1]
      %v1267 = vlaneseq
      %v1268 = vshrl.u32 %v1267, 7
      %v1269 = vsub.s32 0, %v1268
      %v1270 = vrot.slane %v1265, %v1269
      %v1272 = vmul.f32 %v1256, %v1270
      %v1273 = vmul.f32 %v1257, %v1270
      %v1274 = vmul.f32 %v1258, %v1270
      %v1275 = vmul.f32 %v1259, %v1270
      %v1276 = vmul.f32 %v1260, %v1270
      %v1277 = vmul.f32 %v1261, %v1270
      %v1278 = vmul.f32 %v1262, %v1270
      %v1279 = vmul.f32 %v1263, %v1270
      %v1280 = vadd.f32 %v1248, %v1272
      %v1281 = vadd.f32 %v1249, %v1273
      %v1282 = vadd.f32 %v1250, %v1274
      %v1283 = vadd.f32 %v1251, %v1275
      %v1284 = vadd.f32 %v1252, %v1276
      %v1285 = vadd.f32 %v1253, %v1277
      %v1286 = vadd.f32 %v1254, %v1278
      %v1287 = vadd.f32 %v1255, %v1279
      %s1288 = scalar_lea.vmem %s4, 4
      %v1289 = vld [vmem:[%s1288] sm:$0x1]
      %v1291 = vlaneseq
      %v1292 = vshrl.u32 %v1291, 7
      %v1293 = vsub.s32 0, %v1292
      %v1294 = vrot.slane %v1289, %v1293
      %v1296 = vmul.f32 %v867, %v1294
      %v1297 = vmul.f32 %v821, %v1294
      %v1298 = vmul.f32 %v823, %v1294
      %v1299 = vmul.f32 %v825, %v1294
      %v1300 = vmul.f32 %v827, %v1294
      %v1301 = vmul.f32 %v829, %v1294
      %v1302 = vmul.f32 %v831, %v1294
      %v1303 = vmul.f32 %v833, %v1294
      %v1304 = vmul.f32 %v835, %v1294
      %v1305 = vmul.f32 %v837, %v1294
      %v1306 = vmul.f32 %v839, %v1294
      %v1307 = vmul.f32 %v841, %v1294
      %v1308 = vmul.f32 %v843, %v1294
      %v1309 = vmul.f32 %v845, %v1294
      %v1310 = vmul.f32 %v847, %v1294
      %v1311 = vmul.f32 %v849, %v1294
      %v1328 = vrot.slane %v1296, 1
      %v1329 = vrot.slane %v1297, 1
      %v1330 = vsel %vm1135, %v1328, %v1329
      %v1331 = vrot.slane %v1298, 1
      %v1332 = vrot.slane %v1299, 1
      %v1333 = vsel %vm1135, %v1331, %v1332
      %v1334 = vrot.slane %v1300, 1
      %v1335 = vrot.slane %v1301, 1
      %v1336 = vsel %vm1135, %v1334, %v1335
      %v1337 = vrot.slane %v1302, 1
      %v1338 = vrot.slane %v1303, 1
      %v1339 = vsel %vm1135, %v1337, %v1338
      %v1340 = vrot.slane %v1304, 1
      %v1341 = vrot.slane %v1305, 1
      %v1342 = vsel %vm1135, %v1340, %v1341
      %v1343 = vrot.slane %v1306, 1
      %v1344 = vrot.slane %v1307, 1
      %v1345 = vsel %vm1135, %v1343, %v1344
      %v1346 = vrot.slane %v1308, 1
      %v1347 = vrot.slane %v1309, 1
      %v1348 = vsel %vm1135, %v1346, %v1347
      %v1349 = vrot.slane %v1310, 1
      %v1350 = vrot.slane %v1311, 1
      %v1351 = vsel %vm1135, %v1349, %v1350
      %v1360 = vadd.f32 %v1280, %v1330
      %v1361 = vadd.f32 %v1281, %v1333
      %v1362 = vadd.f32 %v1282, %v1336
      %v1363 = vadd.f32 %v1283, %v1339
      %v1364 = vadd.f32 %v1284, %v1342
      %v1365 = vadd.f32 %v1285, %v1345
      %v1366 = vadd.f32 %v1286, %v1348
      %v1367 = vadd.f32 %v1287, %v1351
      %s1368 = scalar_lea.vmem %s4, 5
      %v1369 = vld [vmem:[%s1368] sm:$0x1]
      %v1371 = vlaneseq
      %v1372 = vshrl.u32 %v1371, 7
      %v1373 = vsub.s32 0, %v1372
      %v1374 = vrot.slane %v1369, %v1373
      %v1376 = vmul.f32 %v933, %v1374
      %v1377 = vmul.f32 %v887, %v1374
      %v1378 = vmul.f32 %v889, %v1374
      %v1379 = vmul.f32 %v891, %v1374
      %v1380 = vmul.f32 %v893, %v1374
      %v1381 = vmul.f32 %v895, %v1374
      %v1382 = vmul.f32 %v897, %v1374
      %v1383 = vmul.f32 %v899, %v1374
      %v1384 = vmul.f32 %v901, %v1374
      %v1385 = vmul.f32 %v903, %v1374
      %v1386 = vmul.f32 %v905, %v1374
      %v1387 = vmul.f32 %v907, %v1374
      %v1388 = vmul.f32 %v909, %v1374
      %v1389 = vmul.f32 %v911, %v1374
      %v1390 = vmul.f32 %v913, %v1374
      %v1391 = vmul.f32 %v915, %v1374
      %v1408 = vrot.slane %v1376, 1
      %v1409 = vrot.slane %v1377, 1
      %v1410 = vsel %vm1135, %v1408, %v1409
      %v1411 = vrot.slane %v1378, 1
      %v1412 = vrot.slane %v1379, 1
      %v1413 = vsel %vm1135, %v1411, %v1412
      %v1414 = vrot.slane %v1380, 1
      %v1415 = vrot.slane %v1381, 1
      %v1416 = vsel %vm1135, %v1414, %v1415
      %v1417 = vrot.slane %v1382, 1
      %v1418 = vrot.slane %v1383, 1
      %v1419 = vsel %vm1135, %v1417, %v1418
      %v1420 = vrot.slane %v1384, 1
      %v1421 = vrot.slane %v1385, 1
      %v1422 = vsel %vm1135, %v1420, %v1421
      %v1423 = vrot.slane %v1386, 1
      %v1424 = vrot.slane %v1387, 1
      %v1425 = vsel %vm1135, %v1423, %v1424
      %v1426 = vrot.slane %v1388, 1
      %v1427 = vrot.slane %v1389, 1
      %v1428 = vsel %vm1135, %v1426, %v1427
      %v1429 = vrot.slane %v1390, 1
      %v1430 = vrot.slane %v1391, 1
      %v1431 = vsel %vm1135, %v1429, %v1430
      %v1440 = vadd.f32 %v1360, %v1410
      %v1441 = vadd.f32 %v1361, %v1413
      %v1442 = vadd.f32 %v1362, %v1416
      %v1443 = vadd.f32 %v1363, %v1419
      %v1444 = vadd.f32 %v1364, %v1422
      %v1445 = vadd.f32 %v1365, %v1425
      %v1446 = vadd.f32 %v1366, %v1428
      %v1447 = vadd.f32 %v1367, %v1431
      %v1448 = vmul.f32 %v887, %v1056
      %v1449 = vmul.f32 %v891, %v1057
      %v1450 = vmul.f32 %v895, %v1058
      %v1451 = vmul.f32 %v899, %v1059
      %v1452 = vmul.f32 %v903, %v1060
      %v1453 = vmul.f32 %v907, %v1061
      %v1454 = vmul.f32 %v911, %v1062
      %v1455 = vmul.f32 %v915, %v1063
      %s1456 = scalar_lea.vmem %s4, 6
      %v1457 = vld [vmem:[%s1456] sm:$0x1]
      %v1459 = vlaneseq
      %v1460 = vshrl.u32 %v1459, 7
      %v1461 = vsub.s32 0, %v1460
      %v1462 = vrot.slane %v1457, %v1461
      %v1464 = vmul.f32 %v1448, %v1462
      %v1465 = vmul.f32 %v1449, %v1462
      %v1466 = vmul.f32 %v1450, %v1462
      %v1467 = vmul.f32 %v1451, %v1462
      %v1468 = vmul.f32 %v1452, %v1462
      %v1469 = vmul.f32 %v1453, %v1462
      %v1470 = vmul.f32 %v1454, %v1462
      %v1471 = vmul.f32 %v1455, %v1462
      %v1472 = vadd.f32 %v1440, %v1464
      %v1473 = vadd.f32 %v1441, %v1465
      %v1474 = vadd.f32 %v1442, %v1466
      %v1475 = vadd.f32 %v1443, %v1467
      %v1476 = vadd.f32 %v1444, %v1468
      %v1477 = vadd.f32 %v1445, %v1469
      %v1478 = vadd.f32 %v1446, %v1470
      %v1479 = vadd.f32 %v1447, %v1471
      %s1480 = scalar_lea.vmem %s4, 7
      %v1481 = vld [vmem:[%s1480] sm:$0x1]
      %v1483 = vlaneseq
      %v1484 = vshrl.u32 %v1483, 7
      %v1485 = vsub.s32 0, %v1484
      %v1486 = vrot.slane %v1481, %v1485
      %v1488 = vmul.f32 %v821, %v1486
      %v1489 = vmul.f32 %v823, %v1486
      %v1490 = vmul.f32 %v825, %v1486
      %v1491 = vmul.f32 %v827, %v1486
      %v1492 = vmul.f32 %v829, %v1486
      %v1493 = vmul.f32 %v831, %v1486
      %v1494 = vmul.f32 %v833, %v1486
      %v1495 = vmul.f32 %v835, %v1486
      %v1496 = vmul.f32 %v837, %v1486
      %v1497 = vmul.f32 %v839, %v1486
      %v1498 = vmul.f32 %v841, %v1486
      %v1499 = vmul.f32 %v843, %v1486
      %v1500 = vmul.f32 %v845, %v1486
      %v1501 = vmul.f32 %v847, %v1486
      %v1502 = vmul.f32 %v849, %v1486
      %v1503 = vmul.f32 %v868, %v1486
      %v1520 = vrot.slane %v1488, 1
      %v1521 = vrot.slane %v1489, 1
      %v1522 = vsel %vm1135, %v1520, %v1521
      %v1523 = vrot.slane %v1490, 1
      %v1524 = vrot.slane %v1491, 1
      %v1525 = vsel %vm1135, %v1523, %v1524
      %v1526 = vrot.slane %v1492, 1
      %v1527 = vrot.slane %v1493, 1
      %v1528 = vsel %vm1135, %v1526, %v1527
      %v1529 = vrot.slane %v1494, 1
      %v1530 = vrot.slane %v1495, 1
      %v1531 = vsel %vm1135, %v1529, %v1530
      %v1532 = vrot.slane %v1496, 1
      %v1533 = vrot.slane %v1497, 1
      %v1534 = vsel %vm1135, %v1532, %v1533
      %v1535 = vrot.slane %v1498, 1
      %v1536 = vrot.slane %v1499, 1
      %v1537 = vsel %vm1135, %v1535, %v1536
      %v1538 = vrot.slane %v1500, 1
      %v1539 = vrot.slane %v1501, 1
      %v1540 = vsel %vm1135, %v1538, %v1539
      %v1541 = vrot.slane %v1502, 1
      %v1542 = vrot.slane %v1503, 1
      %v1543 = vsel %vm1135, %v1541, %v1542
      %v1552 = vadd.f32 %v1472, %v1522
      %v1553 = vadd.f32 %v1473, %v1525
      %v1554 = vadd.f32 %v1474, %v1528
      %v1555 = vadd.f32 %v1475, %v1531
      %v1556 = vadd.f32 %v1476, %v1534
      %v1557 = vadd.f32 %v1477, %v1537
      %v1558 = vadd.f32 %v1478, %v1540
      %v1559 = vadd.f32 %v1479, %v1543
      %s1560 = scalar_lea.vmem %s4, 8
      %v1561 = vld [vmem:[%s1560] sm:$0x1]
      %v1563 = vlaneseq
      %v1564 = vshrl.u32 %v1563, 7
      %v1565 = vsub.s32 0, %v1564
      %v1566 = vrot.slane %v1561, %v1565
      %v1568 = vmul.f32 %v887, %v1566
      %v1569 = vmul.f32 %v889, %v1566
      %v1570 = vmul.f32 %v891, %v1566
      %v1571 = vmul.f32 %v893, %v1566
      %v1572 = vmul.f32 %v895, %v1566
      %v1573 = vmul.f32 %v897, %v1566
      %v1574 = vmul.f32 %v899, %v1566
      %v1575 = vmul.f32 %v901, %v1566
      %v1576 = vmul.f32 %v903, %v1566
      %v1577 = vmul.f32 %v905, %v1566
      %v1578 = vmul.f32 %v907, %v1566
      %v1579 = vmul.f32 %v909, %v1566
      %v1580 = vmul.f32 %v911, %v1566
      %v1581 = vmul.f32 %v913, %v1566
      %v1582 = vmul.f32 %v915, %v1566
      %v1583 = vmul.f32 %v934, %v1566
      %v1600 = vrot.slane %v1568, 1
      %v1601 = vrot.slane %v1569, 1
      %v1602 = vsel %vm1135, %v1600, %v1601
      %v1603 = vrot.slane %v1570, 1
      %v1604 = vrot.slane %v1571, 1
      %v1605 = vsel %vm1135, %v1603, %v1604
      %v1606 = vrot.slane %v1572, 1
      %v1607 = vrot.slane %v1573, 1
      %v1608 = vsel %vm1135, %v1606, %v1607
      %v1609 = vrot.slane %v1574, 1
      %v1610 = vrot.slane %v1575, 1
      %v1611 = vsel %vm1135, %v1609, %v1610
      %v1612 = vrot.slane %v1576, 1
      %v1613 = vrot.slane %v1577, 1
      %v1614 = vsel %vm1135, %v1612, %v1613
      %v1615 = vrot.slane %v1578, 1
      %v1616 = vrot.slane %v1579, 1
      %v1617 = vsel %vm1135, %v1615, %v1616
      %v1618 = vrot.slane %v1580, 1
      %v1619 = vrot.slane %v1581, 1
      %v1620 = vsel %vm1135, %v1618, %v1619
      %v1621 = vrot.slane %v1582, 1
      %v1622 = vrot.slane %v1583, 1
      %v1623 = vsel %vm1135, %v1621, %v1622
      %v1632 = vadd.f32 %v1552, %v1602
      %v1633 = vadd.f32 %v1553, %v1605
      %v1634 = vadd.f32 %v1554, %v1608
      %v1635 = vadd.f32 %v1555, %v1611
      %v1636 = vadd.f32 %v1556, %v1614
      %v1637 = vadd.f32 %v1557, %v1617
      %v1638 = vadd.f32 %v1558, %v1620
      %v1639 = vadd.f32 %v1559, %v1623
      %v1640 = vld [vmem:[%s5] sm:$0x1]
      %v1642 = vlaneseq
      %v1643 = vshrl.u32 %v1642, 7
      %v1644 = vsub.s32 0, %v1643
      %v1645 = vrot.slane %v1640, %v1644
      %v1647 = vadd.f32 %v1632, %v1645
      %v1648 = vadd.f32 %v1633, %v1645
      %v1649 = vadd.f32 %v1634, %v1645
      %v1650 = vadd.f32 %v1635, %v1645
      %v1651 = vadd.f32 %v1636, %v1645
      %v1652 = vadd.f32 %v1637, %v1645
      %v1653 = vadd.f32 %v1638, %v1645
      %v1654 = vadd.f32 %v1639, %v1645
      %vm1655 = vcmp.ge.f32.partialorder %v1647, 0.0
      %vm1656 = vcmp.ge.f32.partialorder %v1648, 0.0
      %vm1657 = vcmp.ge.f32.partialorder %v1649, 0.0
      %vm1658 = vcmp.ge.f32.partialorder %v1650, 0.0
      %vm1659 = vcmp.ge.f32.partialorder %v1651, 0.0
      %vm1660 = vcmp.ge.f32.partialorder %v1652, 0.0
      %vm1661 = vcmp.ge.f32.partialorder %v1653, 0.0
      %vm1662 = vcmp.ge.f32.partialorder %v1654, 0.0
      %v1663 = vld [vmem:[%s6] sm:$0x1]
      %v1665 = vlaneseq
      %v1666 = vshrl.u32 %v1665, 7
      %v1667 = vsub.s32 0, %v1666
      %v1668 = vrot.slane %v1663, %v1667
      %v1670 = vmul.f32 %v1647, %v1668
      %v1671 = vmul.f32 %v1648, %v1668
      %v1672 = vmul.f32 %v1649, %v1668
      %v1673 = vmul.f32 %v1650, %v1668
      %v1674 = vmul.f32 %v1651, %v1668
      %v1675 = vmul.f32 %v1652, %v1668
      %v1676 = vmul.f32 %v1653, %v1668
      %v1677 = vmul.f32 %v1654, %v1668
      %v1678 = vsel %vm1655, %v1647, %v1670
      %v1679 = vsel %vm1656, %v1648, %v1671
      %v1680 = vsel %vm1657, %v1649, %v1672
      %v1681 = vsel %vm1658, %v1650, %v1673
      %v1682 = vsel %vm1659, %v1651, %v1674
      %v1683 = vsel %vm1660, %v1652, %v1675
      %v1684 = vsel %vm1661, %v1653, %v1676
      %v1685 = vsel %vm1662, %v1654, %v1677
      %v1686 = vld [vmem:[%s7] sm:$0xff]
      %v1687 = vld [vmem:[%s8] sm:$0x1]
      %v1689 = vlaneseq
      %v1690 = vshrl.u32 %v1689, 7
      %v1691 = vsub.s32 0, %v1690
      %v1692 = vrot.slane %v1687, %v1691
      %vm1694 = vcmask 64512
      %v1696 = vsel %vm1694, %v1678, 0
      %v1699 = vsel %vm1694, %v1679, 0
      %v1702 = vsel %vm1694, %v1680, 0
      %v1705 = vsel %vm1694, %v1681, 0
      %v1708 = vsel %vm1694, %v1682, 0
      %v1711 = vsel %vm1694, %v1683, 0
      %v1714 = vsel %vm1694, %v1684, 0
      %v1717 = vsel %vm1694, %v1685, 0
      %1719 = vmatprep.subr.mxu0 0.0
      %1720 = vmatpush1.msra.mxu0 0.0
      %1721 = vmatprep.subr.mxu0 0.0
      %1722 = vmatpush1.msra.mxu0 0.0
      %1723 = vmatprep.subr.mxu0 0.0
      %1724 = vmatpush1.msra.mxu0 0.0
      %1725 = vmatprep.subr.mxu0 0.0
      %1726 = vmatpush1.msra.mxu0 0.0
      %1727 = vmatprep.subr.mxu0 0.0
      %1728 = vmatpush1.msra.mxu0 0.0
      %1729 = vmatprep.subr.mxu0 0.0
      %1730 = vmatpush1.msra.mxu0 0.0
      %1731 = vmatprep.subr.mxu0 0.0
      %1732 = vmatpush1.msra.mxu0 0.0
      %1733 = vmatprep.subr.mxu0 0.0
      %1734 = vmatpush1.msra.mxu0 0.0
      %1735 = vmatprep.subr.mxu0 0.0
      %1736 = vmatpush1.msra.mxu0 0.0
      %1737 = vmatprep.subr.mxu0 0.0
      %1738 = vmatpush1.msra.mxu0 0.0
      %1739 = vmatprep.subr.mxu0 0.0
      %1740 = vmatpush1.msra.mxu0 0.0
      %1741 = vmatprep.subr.mxu0 0.0
      %1742 = vmatpush1.msra.mxu0 0.0
      %1743 = vmatprep.subr.mxu0 0.0
      %1744 = vmatpush1.msra.mxu0 0.0
      %1745 = vmatprep.subr.mxu0 0.0
      %1746 = vmatpush1.msra.mxu0 0.0
      %1747 = vmatprep.subr.mxu0 0.0
      %1748 = vmatpush1.msra.mxu0 0.0
      %1749 = vmatprep.subr.mxu0 0.0
      %1750 = vmatpush1.msra.mxu0 %v1686
      %1751 = vmatprep.subr.mxu0 0.0
      %1752 = vmatpush2.msra.mxu0 0.0
      %1753 = vmatprep.subr.mxu0 0.0
      %1754 = vmatpush2.msra.mxu0 0.0
      %1755 = vmatprep.subr.mxu0 0.0
      %1756 = vmatpush2.msra.mxu0 0.0
      %1757 = vmatprep.subr.mxu0 0.0
      %1758 = vmatpush2.msra.mxu0 0.0
      %1759 = vmatprep.subr.mxu0 0.0
      %1760 = vmatpush2.msra.mxu0 0.0
      %1761 = vmatprep.subr.mxu0 0.0
      %1762 = vmatpush2.msra.mxu0 0.0
      %1763 = vmatprep.subr.mxu0 0.0
      %1764 = vmatpush2.msra.mxu0 0.0
      %1765 = vmatprep.subr.mxu0 0.0
      %1766 = vmatpush2.msra.mxu0 0.0
      %1767 = vmatprep.subr.mxu0 0.0
      %1768 = vmatpush2.msra.mxu0 0.0
      %1769 = vmatprep.subr.mxu0 0.0
      %1770 = vmatpush2.msra.mxu0 0.0
      %1771 = vmatprep.subr.mxu0 0.0
      %1772 = vmatpush2.msra.mxu0 0.0
      %1773 = vmatprep.subr.mxu0 0.0
      %1774 = vmatpush2.msra.mxu0 0.0
      %1775 = vmatprep.subr.mxu0 0.0
      %1776 = vmatpush2.msra.mxu0 0.0
      %1777 = vmatprep.subr.mxu0 0.0
      %1778 = vmatpush2.msra.mxu0 0.0
      %1779 = vmatprep.subr.mxu0 0.0
      %1780 = vmatpush2.msra.mxu0 0.0
      %1781 = vmatprep.subr.mxu0 0.0
      %1782 = vmatpush2.msra.mxu0 0.0
      %1783 = vmatprep.mubr.f32.mxu0 0.0
      %1784 = vmatmul.mubr.f32.gmra.mxu0 %v1696
      %v1785 = vpop.f32.mrf.mxu0
      %v1786 = vadd.f32 %v1692, %v1785
      %v1787 = vpop.f32.mrf.mxu0
      %1788 = vmatprep.mubr.f32.mxu0 0.0
      %1789 = vmatmul.mubr.f32.gmra.mxu0 %v1699
      %v1790 = vpop.f32.mrf.mxu0
      %v1791 = vadd.f32 %v1692, %v1790
      %v1792 = vpop.f32.mrf.mxu0
      %1793 = vmatprep.mubr.f32.mxu0 0.0
      %1794 = vmatmul.mubr.f32.gmra.mxu0 %v1702
      %v1795 = vpop.f32.mrf.mxu0
      %v1796 = vadd.f32 %v1692, %v1795
      %v1797 = vpop.f32.mrf.mxu0
      %1798 = vmatprep.mubr.f32.mxu0 0.0
      %1799 = vmatmul.mubr.f32.gmra.mxu0 %v1705
      %v1800 = vpop.f32.mrf.mxu0
      %v1801 = vadd.f32 %v1692, %v1800
      %v1802 = vpop.f32.mrf.mxu0
      %1803 = vmatprep.mubr.f32.mxu0 0.0
      %1804 = vmatmul.mubr.f32.gmra.mxu0 %v1708
      %v1805 = vpop.f32.mrf.mxu0
      %v1806 = vadd.f32 %v1692, %v1805
      %v1807 = vpop.f32.mrf.mxu0
      %1808 = vmatprep.mubr.f32.mxu0 0.0
      %1809 = vmatmul.mubr.f32.gmra.mxu0 %v1711
      %v1810 = vpop.f32.mrf.mxu0
      %v1811 = vadd.f32 %v1692, %v1810
      %v1812 = vpop.f32.mrf.mxu0
      %1813 = vmatprep.mubr.f32.mxu0 0.0
      %1814 = vmatmul.mubr.f32.gmra.mxu0 %v1714
      %v1815 = vpop.f32.mrf.mxu0
      %v1816 = vadd.f32 %v1692, %v1815
      %v1817 = vpop.f32.mrf.mxu0
      %1818 = vmatprep.mubr.f32.mxu0 0.0
      %1819 = vmatmul.mubr.f32.gmra.mxu0 %v1717
      %v1820 = vpop.f32.mrf.mxu0
      %v1821 = vadd.f32 %v1692, %v1820
      %v1822 = vpop.f32.mrf.mxu0
      %1823 = vdwg.mxu0
      %1824 = vst.msk [vmem:[%s332] sm:$0xff] %vm373, %v1786
      %1825 = vst.msk [vmem:[%s332 + $0x8] sm:$0xff] %vm373, %v1791
      %1826 = vst.msk [vmem:[%s332 + $0x10] sm:$0xff] %vm373, %v1796
      %1827 = vst.msk [vmem:[%s332 + $0x18] sm:$0xff] %vm373, %v1801
      %1828 = vst.msk [vmem:[%s332 + $0x20] sm:$0xff] %vm373, %v1806
      %1829 = vst.msk [vmem:[%s332 + $0x28] sm:$0xff] %vm373, %v1811
      %1830 = vst.msk [vmem:[%s332 + $0x30] sm:$0xff] %vm373, %v1816
      %1831 = vst.msk [vmem:[%s332 + $0x38] sm:$0xff] %vm373, %v1821
      %p1832 = scmp.lt.s32.totalorder %s20, 1
      %s1833 = scalar_select %p1832, %s20, 1
      %s1834 = smul.addr %s1833, 8
      %s1835 = smul.addr %s1834, 8
      %s1836 = scalar_lea.vmem %s9, %s1835
      // Predicated region
      $region57: #{tpu_custom_call.1} parent=55 // pred_check
        %p1837 = pneg %p232
      $region58: #{tpu_custom_call.1} parent=55 // pred_check_branch
        %1839 = sbr.rel (%p1837) target = $region60
      $region59: #{tpu_custom_call.1} parent=55 // pred_region
        _
      $region60: #{tpu_custom_call.1} parent=55 // pred_fallthru
        _
    $region56: #{tpu_custom_call.1} parent=5 // pred_fallthru
      _
    %p1840 = scmp.le.s32.totalorder 2, %s15
    // Predicated region
    $region61: #{tpu_custom_call.1} parent=5 // pred_check
      %p1841 = pneg %p1840
    $region62: #{tpu_custom_call.1} parent=5 // pred_check_branch
      %1843 = sbr.rel (%p1841) target = $region64
    $region63: #{tpu_custom_call.1} parent=5 // pred_region
      %s1844 = ssub.s32 %s15, 2
      // Predicated region
      $region65: #{tpu_custom_call.1} parent=63 // pred_check
        %p1845 = pneg %p238
      $region66: #{tpu_custom_call.1} parent=63 // pred_check_branch
        %1847 = sbr.rel (%p1845) target = $region68
      $region67: #{tpu_custom_call.1} parent=63 // pred_region
        %p1848 = scmp.lt.s32.totalorder %s21, 1
        %s1849 = scalar_select %p1848, %s21, 1
        %s1850 = smul.addr %s1849, 8
        %s1851 = smul.addr %s1850, 8
        %s1852 = scalar_lea.vmem %s9, %s1851
      $region68: #{tpu_custom_call.1} parent=63 // pred_fallthru
        _
    $region64: #{tpu_custom_call.1} parent=5 // pred_fallthru
      _
  $region6: #{tpu_custom_call.1} parent=0 // loop_footer
    %s19 = sadd.s32 1, %s15
  $region7: #{tpu_custom_call.1} parent=0 // loop_footer_branch
    %14 = sbr.rel target = $region3
  $region8: #{tpu_custom_call.1} parent=0 // loop_exit
    _

</llo_original>
